<compile_context>
chip_gen: v7x
topology: tpu7x:2x2x1
jax: 0.10.0
libtpu: 0.0.40
codegen_flags: <defaults>
</compile_context>

<pallas_src>
import math
import numpy as np
import jax
import jax.numpy as jnp
from jax import lax
from jax.experimental import pallas as pl
from jax.experimental.pallas import tpu as pltpu

WINDOW_SIZE = 11


def _gaussian_1d_np(window_size: int, sigma: float = 1.5) -> np.ndarray:
    # Matches Gaussian() from the PyTorch reference.
    g = np.array(
        [math.exp(-((x - window_size // 2) ** 2) / float(2 * sigma ** 2))
         for x in range(window_size)],
        dtype=np.float32)
    return (g / g.sum()).astype(np.float32)


def _round_up(x: int, m: int) -> int:
    return (x + m - 1) // m * m


def _band_matrices_np(H: int, W: int, win: int):
    """Lane/sublane-padded banded matrices for the separable 11-tap 'valid' conv.

    horizontal pass: (5*C*H, W) @ band_w -> (5*C*H, Wo_pad), band_w[j+dx, j]=g[dx]
                     (columns >= Wo are zero: lane padding to a multiple of 128).
    vertical pass:   band_h @ (H, Wo_pad) -> (Ho_pad, Wo_pad), band_h[i, i+dy]=g[dy]
                     (rows >= Ho are zero: sublane padding to a multiple of 8).
    window2d[dy, dx] = g[dy]*g[dx] reproduces F.conv2d(..., padding=0, groups=C).
    """
    g = _gaussian_1d_np(win)
    Ho, Wo = H - win + 1, W - win + 1
    Wo_pad = _round_up(Wo, 128)
    Ho_pad = _round_up(Ho, 8)
    band_w = np.zeros((W, Wo_pad), np.float32)
    band_h = np.zeros((Ho_pad, H), np.float32)
    for j in range(Wo):
        band_w[j:j + win, j] = g
    for i in range(Ho):
        band_h[i, i:i + win] = g
    return band_w, band_h


def ssim_pallas(img1: jax.Array, img2: jax.Array) -> jax.Array:
    """SSIM(window_size=11, size_average=True, data_range=None).forward(img1, img2)."""
    N, C, H, W = img1.shape
    win = WINDOW_SIZE
    assert H >= win and W >= win, "spatial dims must be >= window_size"
    Ho, Wo = H - win + 1, W - win + 1
    Wo_pad = _round_up(Wo, 128)
    Ho_pad = _round_up(Ho, 8)

    # data_range=None logic from the reference (uses img1 only), as a plain XLA
    # reduce so the Pallas kernel never needs the full tensor VMEM-resident.
    x1 = img1.astype(jnp.float32)
    max_val = jnp.where(jnp.max(x1) > 128.0, 255.0, 1.0)
    min_val = jnp.where(jnp.min(x1) < -0.5, -1.0, 0.0)
    L = max_val - min_val
    c1c2 = jnp.stack([(0.01 * L) ** 2, (0.03 * L) ** 2]).astype(jnp.float32)  # (2,)

    band_w_np, band_h_np = _band_matrices_np(H, W, win)
    band_w = jnp.asarray(band_w_np)    # (W, Wo_pad)
    band_h = jnp.asarray(band_h_np)    # (Ho_pad, H)

    def kernel(c_ref, bw_ref, bh_ref, img1_ref, img2_ref, out_ref):
        C1 = c_ref[0]
        C2 = c_ref[1]
        bw = bw_ref[...]                               # (W, Wo_pad)
        bh = bh_ref[...]                               # (Ho_pad, H)

        p1 = img1_ref[0].astype(jnp.float32)           # (C, H, W)
        p2 = img2_ref[0].astype(jnp.float32)

        # Five statistic planes of every channel stacked on the matmul M dim;
        # products are formed once and consumed immediately by the fused matmul.
        stats = jnp.concatenate([p1, p2, p1 * p1, p2 * p2, p1 * p2], axis=0)
        x = stats.reshape(5 * C * H, W)

        # Fused separable Gaussian conv on the MXU:
        #   horizontal: ONE (5*C*H, W) @ (W, Wo_pad) matmul (M = 5*C*H fills the array),
        #   vertical:   ONE batched (5*C)-deep (Ho_pad, H) @ (H, Wo_pad) matmul.
        t = jnp.dot(x, bw, preferred_element_type=jnp.float32)     # (5CH, Wo_pad)
        t3 = t.reshape(5 * C, H, Wo_pad)
        bh_b = jnp.broadcast_to(bh[None], (5 * C, Ho_pad, H))
        v = jnp.einsum('pij,pjk->pik', bh_b, t3,
                       preferred_element_type=jnp.float32)         # (5C, Ho_pad, Wo_pad)

        mu1, mu2 = v[0:C], v[C:2 * C]
        e11, e22, e12 = v[2 * C:3 * C], v[3 * C:4 * C], v[4 * C:5 * C]

        mu1_sq = mu1 * mu1
        mu2_sq = mu2 * mu2
        mu1_mu2 = mu1 * mu2
        sigma1_sq = e11 - mu1_sq
        sigma2_sq = e22 - mu2_sq
        sigma12 = e12 - mu1_mu2

        v1 = 2.0 * sigma12 + C2
        v2 = sigma1_sq + sigma2_sq + C2
        num = (2.0 * mu1_mu2 + C1) * v1
        den = (mu1_sq + mu2_sq + C1) * v2

        # den > 0 always (C1, C2 > 0): EUP approximate reciprocal alone is
        # inside the required tolerance (Newton step dropped per review).
        ssim_map = num * pl.reciprocal(den, approx=True)

        # Sublane (Ho) padding rows evaluate to ssim ~= 1, not 0 -> mask them.
        # Lane (Wo) padding columns are sliced off by the wrapper.
        row = lax.broadcasted_iota(jnp.int32, (C, Ho_pad, Wo_pad), 1)
        ssim_map = jnp.where(row < Ho, ssim_map, 0.0)

        # Lane-dense per-step partial: reduce channel + sublane axes only; the
        # wrapper performs the final cross-lane reduce.
        out_ref[...] = jnp.sum(ssim_map, axis=(0, 1)).reshape(1, 1, Wo_pad)

    # Explicit scoped-VMEM limit sized from the per-step working set (default
    # 16/32 MiB would otherwise cap block sizes first on v5e/v6e/v7x).
    f32 = 4
    per_step = (
        2 * 2 * C * H * W * f32              # img1/img2 blocks, double-buffered
        + (W * Wo_pad + Ho_pad * H) * f32    # band matrices (single-buffered)
        + 5 * C * H * W * f32                # stacked statistics planes
        + 5 * C * H * Wo_pad * f32           # horizontal-pass result
        + 5 * C * Ho_pad * Wo_pad * f32      # conv outputs
        + 8 * C * Ho_pad * Wo_pad * f32      # ssim-map temporaries (generous)
        + 2 * 1 * Wo_pad * f32)              # output block
    vmem_limit = int(min(100 * 2 ** 20, max(32 * 2 ** 20, 2 * per_step)))

    out = pl.pallas_call(
        kernel,
        out_shape=jax.ShapeDtypeStruct((N, 1, Wo_pad), jnp.float32),
        grid=(N,),
        in_specs=[
            pl.BlockSpec(memory_space=pltpu.MemorySpace.SMEM),      # C1, C2 (1-D)
            pl.BlockSpec((W, Wo_pad), lambda n: (0, 0),
                         pipeline_mode=pl.Buffered(1)),             # band_w (constant)
            pl.BlockSpec((Ho_pad, H), lambda n: (0, 0),
                         pipeline_mode=pl.Buffered(1)),             # band_h (constant)
            pl.BlockSpec((1, C, H, W), lambda n: (n, 0, 0, 0)),     # img1: all channels
            pl.BlockSpec((1, C, H, W), lambda n: (n, 0, 0, 0)),     # img2: all channels
        ],
        out_specs=pl.BlockSpec((1, 1, Wo_pad), lambda n: (n, 0, 0)),
        compiler_params=pltpu.CompilerParams(
            dimension_semantics=("parallel",),
            vmem_limit_bytes=vmem_limit),
    )(c1c2, band_w, band_h, img1, img2)

    # Final cheap XLA reduce: drop the Wo lane padding, then mean.
    partials = out[:, 0, :Wo]                            # (N, Wo) per-lane sums
    return jnp.sum(partials) / float(N * C * Ho * Wo)    # size_average=True


def _ssim_reference_jax(img1, img2):
    """Plain-JAX reference mirroring the PyTorch code, for correctness checking."""
    img1 = img1.astype(jnp.float32)
    img2 = img2.astype(jnp.float32)
    max_val = jnp.where(jnp.max(img1) > 128.0, 255.0, 1.0)
    min_val = jnp.where(jnp.min(img1) < -0.5, -1.0, 0.0)
    L = max_val - min_val
    C1 = (0.01 * L) ** 2
    C2 = (0.03 * L) ** 2
    channel = img1.shape[1]
    g = jnp.asarray(_gaussian_1d_np(WINDOW_SIZE))
    win2d = jnp.outer(g, g)[None, None]                       # (1,1,ws,ws)
    win2d = jnp.broadcast_to(win2d, (channel, 1, WINDOW_SIZE, WINDOW_SIZE))

    def dconv(x):
        return lax.conv_general_dilated(
            x, win2d, window_strides=(1, 1), padding="VALID",
            feature_group_count=channel,
            dimension_numbers=("NCHW", "OIHW", "NCHW"))

    mu1, mu2 = dconv(img1), dconv(img2)
    mu1_sq, mu2_sq, mu1_mu2 = mu1 * mu1, mu2 * mu2, mu1 * mu2
    sigma1_sq = dconv(img1 * img1) - mu1_sq
    sigma2_sq = dconv(img2 * img2) - mu2_sq
    sigma12 = dconv(img1 * img2) - mu1_mu2
    v1 = 2.0 * sigma12 + C2
    v2 = sigma1_sq + sigma2_sq + C2
    ssim_map = (2 * mu1_mu2 + C1) * v1 / ((mu1_sq + mu2_sq + C1) * v2)
    return jnp.mean(ssim_map)


if __name__ == "__main__":
    key = jax.random.PRNGKey(0)
    k1, k2 = jax.random.split(key)
    # N=2, C=4, H=W=16 (spatial must be >= window_size=11 for the "valid" conv)
    img1 = jax.random.normal(k1, (2, 4, 16, 16), dtype=jnp.float32)
    img2 = img1 + 0.1 * jax.random.normal(k2, (2, 4, 16, 16), dtype=jnp.float32)

    result = jax.block_until_ready(ssim_pallas(img1, img2))
    ref = jax.block_until_ready(_ssim_reference_jax(img1, img2))
    assert np.allclose(np.asarray(result), np.asarray(ref), rtol=1e-3, atol=1e-3), (
        float(result), float(ref))
    print("KERNEL_OK")
</pallas_src>

<mosaic_0001>
module attributes {stable_mosaic.version = 11 : i64} {
  func.func @kernel(%arg0: i32, %arg1: memref<2xf32, #tpu.memory_space<smem>>, %arg2: memref<16x128xf32, #tpu.memory_space<vmem>>, %arg3: memref<8x16xf32, #tpu.memory_space<vmem>>, %arg4: memref<1x4x16x16xf32, #tpu.memory_space<vmem>>, %arg5: memref<1x4x16x16xf32, #tpu.memory_space<vmem>>, %arg6: memref<1x1x128xf32, #tpu.memory_space<vmem>>) attributes {dimension_semantics = [#tpu.dimension_semantics<parallel>], iteration_bounds = array<i64: 2>, scalar_prefetch = 0 : i64, scratch_operands = 0 : i64, tpu.core_type = #tpu.core_type<tc>, window_params = [{transform_indices = @transform_0, window_bounds = array<i64: 2>}, {pipeline_mode = #tpu.pipeline_mode<synchronous>, transform_indices = @transform_1, window_bounds = array<i64: 16, 128>}, {pipeline_mode = #tpu.pipeline_mode<synchronous>, transform_indices = @transform_2, window_bounds = array<i64: 8, 16>}, {transform_indices = @transform_3, window_bounds = array<i64: 1, 4, 16, 16>}, {transform_indices = @transform_4, window_bounds = array<i64: 1, 4, 16, 16>}, {transform_indices = @transform_5, window_bounds = array<i64: 1, 1, 128>}]} {
    %c0 = arith.constant 0 : index
    %0 = memref.load %arg1[%c0] : memref<2xf32, #tpu.memory_space<smem>>
    %c1 = arith.constant 1 : index
    %1 = memref.load %arg1[%c1] : memref<2xf32, #tpu.memory_space<smem>>
    %c0_0 = arith.constant 0 : index
    %c0_1 = arith.constant 0 : index
    %2 = vector.load %arg2[%c0_0, %c0_1] : memref<16x128xf32, #tpu.memory_space<vmem>>, vector<16x128xf32>
    %c0_2 = arith.constant 0 : index
    %c0_3 = arith.constant 0 : index
    %3 = vector.load %arg3[%c0_2, %c0_3] : memref<8x16xf32, #tpu.memory_space<vmem>>, vector<8x16xf32>
    %c0_4 = arith.constant 0 : index
    %c0_5 = arith.constant 0 : index
    %c0_6 = arith.constant 0 : index
    %c0_7 = arith.constant 0 : index
    %4 = vector.load %arg4[%c0_4, %c0_5, %c0_6, %c0_7] : memref<1x4x16x16xf32, #tpu.memory_space<vmem>>, vector<1x4x16x16xf32>
    %5 = vector.shape_cast %4 : vector<1x4x16x16xf32> to vector<4x16x16xf32>
    %c0_8 = arith.constant 0 : index
    %c0_9 = arith.constant 0 : index
    %c0_10 = arith.constant 0 : index
    %c0_11 = arith.constant 0 : index
    %6 = vector.load %arg5[%c0_8, %c0_9, %c0_10, %c0_11] : memref<1x4x16x16xf32, #tpu.memory_space<vmem>>, vector<1x4x16x16xf32>
    %7 = vector.shape_cast %6 : vector<1x4x16x16xf32> to vector<4x16x16xf32>
    %8 = arith.mulf %5, %5 : vector<4x16x16xf32>
    %9 = arith.mulf %7, %7 : vector<4x16x16xf32>
    %10 = arith.mulf %5, %7 : vector<4x16x16xf32>
    %11 = tpu.concatenate %5, %7, %8, %9, %10 in 0 : vector<4x16x16xf32>, vector<4x16x16xf32>, vector<4x16x16xf32>, vector<4x16x16xf32>, vector<4x16x16xf32> -> vector<20x16x16xf32>
    %12 = vector.shape_cast %11 : vector<20x16x16xf32> to vector<320x16xf32>
    %cst = arith.constant dense<0.000000e+00> : vector<320x128xf32>
    %13 = tpu.matmul %12, %2, %cst {dimension_numbers = #tpu.dot_dimension_numbers<[1], [0], [0], [1], [0, 0, 1, 1], [], []>} : vector<320x16xf32>, vector<16x128xf32>, vector<320x128xf32> -> vector<320x128xf32>
    %14 = vector.shape_cast %13 : vector<320x128xf32> to vector<20x16x128xf32>
    %15 = vector.shape_cast %3 : vector<8x16xf32> to vector<1x8x16xf32>
    %16 = vector.shape_cast %15 : vector<1x8x16xf32> to vector<1x8x16xf32>
    %17 = vector.broadcast %16 : vector<1x8x16xf32> to vector<20x8x16xf32>
    "tpu.trace_start"() <{level = 10 : i32, message = "pij,pjk->pik"}> : () -> ()
    %cst_12 = arith.constant dense<0.000000e+00> : vector<20x8x128xf32>
    %18 = tpu.matmul %17, %14, %cst_12 {dimension_numbers = #tpu.dot_dimension_numbers<[2], [1], [1], [2], [0, 0, 0, 1, 1, 2], [0], [0]>} : vector<20x8x16xf32>, vector<20x16x128xf32>, vector<20x8x128xf32> -> vector<20x8x128xf32>
    "tpu.trace_stop"() : () -> ()
    %19 = vector.extract_strided_slice %18 {offsets = [0, 0, 0], sizes = [4, 8, 128], strides = [1, 1, 1]} : vector<20x8x128xf32> to vector<4x8x128xf32>
    %20 = vector.extract_strided_slice %18 {offsets = [4, 0, 0], sizes = [4, 8, 128], strides = [1, 1, 1]} : vector<20x8x128xf32> to vector<4x8x128xf32>
    %21 = vector.extract_strided_slice %18 {offsets = [8, 0, 0], sizes = [4, 8, 128], strides = [1, 1, 1]} : vector<20x8x128xf32> to vector<4x8x128xf32>
    %22 = vector.extract_strided_slice %18 {offsets = [12, 0, 0], sizes = [4, 8, 128], strides = [1, 1, 1]} : vector<20x8x128xf32> to vector<4x8x128xf32>
    %23 = vector.extract_strided_slice %18 {offsets = [16, 0, 0], sizes = [4, 8, 128], strides = [1, 1, 1]} : vector<20x8x128xf32> to vector<4x8x128xf32>
    %24 = arith.mulf %19, %19 : vector<4x8x128xf32>
    %25 = arith.mulf %20, %20 : vector<4x8x128xf32>
    %26 = arith.mulf %19, %20 : vector<4x8x128xf32>
    %27 = arith.subf %21, %24 : vector<4x8x128xf32>
    %28 = arith.subf %22, %25 : vector<4x8x128xf32>
    %29 = arith.subf %23, %26 : vector<4x8x128xf32>
    %cst_13 = arith.constant 2.000000e+00 : f32
    %30 = vector.broadcast %cst_13 : f32 to vector<4x8x128xf32>
    %31 = arith.mulf %30, %29 : vector<4x8x128xf32>
    %32 = vector.broadcast %1 : f32 to vector<4x8x128xf32>
    %33 = arith.addf %31, %32 : vector<4x8x128xf32>
    %34 = arith.addf %27, %28 : vector<4x8x128xf32>
    %35 = vector.broadcast %1 : f32 to vector<4x8x128xf32>
    %36 = arith.addf %34, %35 : vector<4x8x128xf32>
    %cst_14 = arith.constant 2.000000e+00 : f32
    %37 = vector.broadcast %cst_14 : f32 to vector<4x8x128xf32>
    %38 = arith.mulf %37, %26 : vector<4x8x128xf32>
    %39 = vector.broadcast %0 : f32 to vector<4x8x128xf32>
    %40 = arith.addf %38, %39 : vector<4x8x128xf32>
    %41 = arith.mulf %40, %33 : vector<4x8x128xf32>
    %42 = arith.addf %24, %25 : vector<4x8x128xf32>
    %43 = vector.broadcast %0 : f32 to vector<4x8x128xf32>
    %44 = arith.addf %42, %43 : vector<4x8x128xf32>
    %45 = arith.mulf %44, %36 : vector<4x8x128xf32>
    %46 = tpu.reciprocal %45 {approx = true} : vector<4x8x128xf32> -> vector<4x8x128xf32>
    %47 = arith.mulf %41, %46 : vector<4x8x128xf32>
    %48 = tpu.iota {dimensions = array<i32: 1>} : vector<4x8x128xi32>
    %c6_i32 = arith.constant 6 : i32
    %49 = vector.broadcast %c6_i32 : i32 to vector<4x8x128xi32>
    %50 = arith.cmpi slt, %48, %49 : vector<4x8x128xi32>
    %cst_15 = arith.constant 0.000000e+00 : f32
    %51 = vector.broadcast %cst_15 : f32 to vector<4x8x128xf32>
    %52 = arith.select %50, %47, %51 : vector<4x8x128xi1>, vector<4x8x128xf32>
    %cst_16 = arith.constant dense<0.000000e+00> : vector<128xf32>
    %53 = vector.multi_reduction <add>, %52, %cst_16 [0, 1] : vector<4x8x128xf32> to vector<128xf32>
    %54 = vector.shape_cast %53 : vector<128xf32> to vector<1x1x128xf32>
    %c0_17 = arith.constant 0 : index
    %c0_18 = arith.constant 0 : index
    %c0_19 = arith.constant 0 : index
    %55 = vector.load %arg6[%c0_17, %c0_18, %c0_19] : memref<1x1x128xf32, #tpu.memory_space<vmem>>, vector<1x1x128xf32>
    tpu.vector_store %arg6[%c0_17, %c0_18, %c0_19], %54 {strides = array<i32>} : memref<1x1x128xf32, #tpu.memory_space<vmem>>, vector<1x1x128xf32>,
    return
  }
  func.func @transform_0(%arg0: i32) -> i32 {
    %c0_i32 = arith.constant 0 : i32
    %c0_i32_0 = arith.constant 0 : i32
    return %c0_i32 : i32
  }
  func.func @transform_1(%arg0: i32) -> (i32, i32) {
    %c0_i32 = arith.constant 0 : i32
    %c0_i32_0 = arith.constant 0 : i32
    %c0_i32_1 = arith.constant 0 : i32
    return %c0_i32, %c0_i32_0 : i32, i32
  }
  func.func @transform_2(%arg0: i32) -> (i32, i32) {
    %c0_i32 = arith.constant 0 : i32
    %c0_i32_0 = arith.constant 0 : i32
    %c0_i32_1 = arith.constant 0 : i32
    return %c0_i32, %c0_i32_0 : i32, i32
  }
  func.func @transform_3(%arg0: i32) -> (i32, i32, i32, i32) {
    %c0_i32 = arith.constant 0 : i32
    %c0_i32_0 = arith.constant 0 : i32
    %c0_i32_1 = arith.constant 0 : i32
    %c0_i32_2 = arith.constant 0 : i32
    return %arg0, %c0_i32, %c0_i32_0, %c0_i32_1 : i32, i32, i32, i32
  }
  func.func @transform_4(%arg0: i32) -> (i32, i32, i32, i32) {
    %c0_i32 = arith.constant 0 : i32
    %c0_i32_0 = arith.constant 0 : i32
    %c0_i32_1 = arith.constant 0 : i32
    %c0_i32_2 = arith.constant 0 : i32
    return %arg0, %c0_i32, %c0_i32_0, %c0_i32_1 : i32, i32, i32, i32
  }
  func.func @transform_5(%arg0: i32) -> (i32, i32, i32) {
    %c0_i32 = arith.constant 0 : i32
    %c0_i32_0 = arith.constant 0 : i32
    %c0_i32_1 = arith.constant 0 : i32
    return %arg0, %c0_i32, %c0_i32_0 : i32, i32, i32
  }
}

</mosaic_0001>

<llo_original>
// kernel: tpu_custom_call.1
$region0: #{tpu_custom_call.1}
  #allocation0 [shape = 'u32[]', space=smem, size = 0x4, offset = 0x4, fixed_abs, tag = 'smem constant byte address 0x4 - core index']
  #allocation1 [shape = 'u32[144,128]{1,0:T(1,128)}', space=vmem, size = 0x12000, scoped, tag = 'internal scratch']
  %s0 = inlined_call_operand.hbm [shape: f32[2], index: 0, kind: input, shape index: {}]
  %s1 = inlined_call_operand.hbm [shape: f32[16,128], index: 1, kind: input, shape index: {}]
  %s2 = inlined_call_operand.hbm [shape: f32[8,16], index: 2, kind: input, shape index: {}]
  %s3 = inlined_call_operand.hbm [shape: f32[2,4,16,16], index: 3, kind: input, shape index: {}]
  %s4 = inlined_call_operand.hbm [shape: f32[2,4,16,16], index: 4, kind: input, shape index: {}]
  %s5 = inlined_call_operand.hbm [shape: f32[2,1,128], index: 5, kind: output, shape index: {}]
  %s6 = sld [smem:[#allocation0]]
  $region73: #{tpu_custom_call.1} parent=0
    _
  %s8 = ssub.s32 1, %s6
  %s9 = scalar_select 0, %s8, %s6
  $region1: #{tpu_custom_call.1} parent=0
    #allocation2 [shape = 'u8[512]{0}', space=smem, size = 0x200, scoped, tag = 'input window, operand 0, single buffered']
    #allocation3 [shape = 's32[2]{0}', space=sflag, size = 0x8, scoped, tag = 'scoped memory for tpu_custom_call.1']
    #allocation4 [shape = 's32[2]{0}', space=sflag, size = 0x8, scoped, tag = 'scoped memory for tpu_custom_call.1']
    #allocation5 [shape = 's32[2]{0}', space=sflag, size = 0x8, scoped, tag = 'scoped memory for tpu_custom_call.1']
    #allocation6 [shape = 'u8[8192]{0}', space=vmem, size = 0x2000, scoped, tag = 'input window, operand 1, single buffered']
    #allocation7 [shape = 'u8[4096]{0}', space=vmem, size = 0x1000, scoped, tag = 'input window, operand 2, single buffered']
    #allocation8 [shape = 's32[1]{0}', space=sflag, size = 0x4, scoped, tag = 'scoped memory for tpu_custom_call.1']
    #allocation9 [shape = 'u8[65536]{0}', space=vmem, size = 0x10000, scoped, tag = 'input window, operand 3']
    #allocation10 [shape = 'u8[65536]{0}', space=vmem, size = 0x10000, scoped, tag = 'input window, operand 4']
    #allocation11 [shape = 'u8[1024]{0}', space=vmem, size = 0x400, scoped, tag = 'output window, operand 0']
    %10 = vsyncpa [#allocation5], 0
    %11 = vsyncpa [#allocation3], 0
    %12 = vsyncpa [#allocation8], 0
    %13 = vsyncpa [#allocation4], 0
    %s14 = scalar_lea.sflag [#allocation4], 1
    %15 = vsyncpa %s14, 0
    loop: start=0, step=1, limit=4
    $region2: #{tpu_custom_call.1} parent=1 // loop_pre_header
      _
    $region3: #{tpu_custom_call.1} parent=1 // loop_header
      %s17 = sphi 0, %s21
      %p18 = scmp.ge.s32.totalorder %s17, 4
      %s25 = sphi 0, %s25
      %s27 = sphi 0, %s25
      %s28 = sphi 0, %s27
      %s42 = sphi 0, %s28
      %s46 = sphi 0, %s46
      %s48 = sphi 0, %s46
      %s49 = sphi 0, %s48
      %s63 = sphi 0, %s49
      %s67 = sphi 0, %s67
      %s69 = sphi 0, %s67
      %s70 = sphi 0, %s69
      %s84 = sphi 0, %s70
      %s90 = sphi 0, %s92
      %s93 = sphi 0, %s90
      %s94 = sphi 0, %s93
      %s110 = sphi 0, %s94
      %s116 = sphi 0, %s118
      %s119 = sphi 0, %s116
      %s120 = sphi 0, %s119
      %s136 = sphi 0, %s120
      %s142 = sphi 0, %s144
      %s145 = sphi 0, %s142
      %s146 = sphi 0, %s145
      %s162 = sphi 0, %s146
    $region4: #{tpu_custom_call.1} parent=1 // loop_header_branch
      %20 = sbr.rel (%p18) target = $region8
    $region5: #{tpu_custom_call.1} parent=1 // loop_body
      %s22 = ssub.s32 %s17, 1
      %s23 = ssub.s32 %s17, 2
      %s24 = sadd.s32 %s17, 1
      %s26 = sadd.s32 %s25, 1
      %p29 = scmp.eq.s32.totalorder %s17, 1
      %p30 = scmp.ne.s32.totalorder %s25, %s27
      %p31 = scmp.eq.s32.totalorder %s17, 0
      %p32 = por %p30, %p31
      %p33 = scmp.ne.s32.totalorder %s25, %s27
      %p34 = scmp.eq.s32.totalorder %s22, 1
      %p35 = por %p33, %p34
      %p36 = scmp.ne.s32.totalorder %s27, %s28
      %p37 = scmp.eq.s32.totalorder %s22, 0
      %p38 = por %p36, %p37
      %p39 = scmp.ne.s32.totalorder %s27, %s28
      %p40 = scmp.eq.s32.totalorder %s23, 1
      %p41 = por %p39, %p40
      %p43 = scmp.ne.s32.totalorder %s28, %s42
      %p44 = scmp.eq.s32.totalorder %s23, 0
      %p45 = por %p43, %p44
      %s47 = sadd.s32 %s46, 1
      %p50 = scmp.eq.s32.totalorder %s17, 1
      %p51 = scmp.ne.s32.totalorder %s46, %s48
      %p52 = scmp.eq.s32.totalorder %s17, 0
      %p53 = por %p51, %p52
      %p54 = scmp.ne.s32.totalorder %s46, %s48
      %p55 = scmp.eq.s32.totalorder %s22, 1
      %p56 = por %p54, %p55
      %p57 = scmp.ne.s32.totalorder %s48, %s49
      %p58 = scmp.eq.s32.totalorder %s22, 0
      %p59 = por %p57, %p58
      %p60 = scmp.ne.s32.totalorder %s48, %s49
      %p61 = scmp.eq.s32.totalorder %s23, 1
      %p62 = por %p60, %p61
      %p64 = scmp.ne.s32.totalorder %s49, %s63
      %p65 = scmp.eq.s32.totalorder %s23, 0
      %p66 = por %p64, %p65
      %s68 = sadd.s32 %s67, 1
      %p71 = scmp.eq.s32.totalorder %s17, 1
      %p72 = scmp.ne.s32.totalorder %s67, %s69
      %p73 = scmp.eq.s32.totalorder %s17, 0
      %p74 = por %p72, %p73
      %p75 = scmp.ne.s32.totalorder %s67, %s69
      %p76 = scmp.eq.s32.totalorder %s22, 1
      %p77 = por %p75, %p76
      %p78 = scmp.ne.s32.totalorder %s69, %s70
      %p79 = scmp.eq.s32.totalorder %s22, 0
      %p80 = por %p78, %p79
      %p81 = scmp.ne.s32.totalorder %s69, %s70
      %p82 = scmp.eq.s32.totalorder %s23, 1
      %p83 = por %p81, %p82
      %p85 = scmp.ne.s32.totalorder %s70, %s84
      %p86 = scmp.eq.s32.totalorder %s23, 0
      %p87 = por %p85, %p86
      %s88 = ssub.s32 %s17, %s24
      %p89 = scmp.eq.s32.totalorder %s88, 0
      %s91 = sadd.s32 %s90, 1
      %s92 = scalar_select %p89, %s90, %s91
      %p95 = pneg %p89
      %p96 = scmp.eq.s32.totalorder %s17, 1
      %p97 = por %p95, %p96
      %p98 = scmp.ne.s32.totalorder %s90, %s93
      %p99 = scmp.eq.s32.totalorder %s17, 0
      %p100 = por %p98, %p99
      %p101 = scmp.ne.s32.totalorder %s90, %s93
      %p102 = scmp.eq.s32.totalorder %s22, 1
      %p103 = por %p101, %p102
      %p104 = scmp.ne.s32.totalorder %s93, %s94
      %p105 = scmp.eq.s32.totalorder %s22, 0
      %p106 = por %p104, %p105
      %p107 = scmp.ne.s32.totalorder %s93, %s94
      %p108 = scmp.eq.s32.totalorder %s23, 1
      %p109 = por %p107, %p108
      %p111 = scmp.ne.s32.totalorder %s94, %s110
      %p112 = scmp.eq.s32.totalorder %s23, 0
      %p113 = por %p111, %p112
      %s114 = ssub.s32 %s17, %s24
      %p115 = scmp.eq.s32.totalorder %s114, 0
      %s117 = sadd.s32 %s116, 1
      %s118 = scalar_select %p115, %s116, %s117
      %p121 = pneg %p115
      %p122 = scmp.eq.s32.totalorder %s17, 1
      %p123 = por %p121, %p122
      %p124 = scmp.ne.s32.totalorder %s116, %s119
      %p125 = scmp.eq.s32.totalorder %s17, 0
      %p126 = por %p124, %p125
      %p127 = scmp.ne.s32.totalorder %s116, %s119
      %p128 = scmp.eq.s32.totalorder %s22, 1
      %p129 = por %p127, %p128
      %p130 = scmp.ne.s32.totalorder %s119, %s120
      %p131 = scmp.eq.s32.totalorder %s22, 0
      %p132 = por %p130, %p131
      %p133 = scmp.ne.s32.totalorder %s119, %s120
      %p134 = scmp.eq.s32.totalorder %s23, 1
      %p135 = por %p133, %p134
      %p137 = scmp.ne.s32.totalorder %s120, %s136
      %p138 = scmp.eq.s32.totalorder %s23, 0
      %p139 = por %p137, %p138
      %s140 = ssub.s32 %s17, %s24
      %p141 = scmp.eq.s32.totalorder %s140, 0
      %s143 = sadd.s32 %s142, 1
      %s144 = scalar_select %p141, %s142, %s143
      %p147 = pneg %p141
      %p148 = scmp.eq.s32.totalorder %s17, 1
      %p149 = por %p147, %p148
      %p150 = scmp.ne.s32.totalorder %s142, %s145
      %p151 = scmp.eq.s32.totalorder %s17, 0
      %p152 = por %p150, %p151
      %p153 = scmp.ne.s32.totalorder %s142, %s145
      %p154 = scmp.eq.s32.totalorder %s22, 1
      %p155 = por %p153, %p154
      %p156 = scmp.ne.s32.totalorder %s145, %s146
      %p157 = scmp.eq.s32.totalorder %s22, 0
      %p158 = por %p156, %p157
      %p159 = scmp.ne.s32.totalorder %s145, %s146
      %p160 = scmp.eq.s32.totalorder %s23, 1
      %p161 = por %p159, %p160
      %p163 = scmp.ne.s32.totalorder %s146, %s162
      %p164 = scmp.eq.s32.totalorder %s23, 0
      %p165 = por %p163, %p164
      %p166 = scmp.le.s32.totalorder 1, %s17
      %p167 = scmp.lt.s32.totalorder %s17, 3
      %p168 = pnand %p166, %p167
      %p169 = pneg %p168
      // Predicated region
      $region9: #{tpu_custom_call.1} parent=5 // pred_check
        _
      $region10: #{tpu_custom_call.1} parent=5 // pred_check_branch
        %171 = sbr.rel (%p168) target = $region12
      $region11: #{tpu_custom_call.1} parent=5 // pred_region
        %s172 = ssub.s32 %s17, 1
        // Predicated region
        $region13: #{tpu_custom_call.1} parent=11 // pred_check
          %p173 = pneg %p38
        $region14: #{tpu_custom_call.1} parent=11 // pred_check_branch
          %175 = sbr.rel (%p173) target = $region16
        $region15: #{tpu_custom_call.1} parent=11 // pred_region
          %s177 = ssub.s32 16, 16
          %178 = vsyncadd [#allocation5], %s177
          %181 = dma.hbm_to_smem %s0, 16, [#allocation2], [#allocation5]
        $region16: #{tpu_custom_call.1} parent=11 // pred_fallthru
          _
        // Predicated region
        $region17: #{tpu_custom_call.1} parent=11 // pred_check
          %p182 = pneg %p59
        $region18: #{tpu_custom_call.1} parent=11 // pred_check_branch
          %184 = sbr.rel (%p182) target = $region20
        $region19: #{tpu_custom_call.1} parent=11 // pred_region
          %s186 = ssub.s32 256, 256
          %187 = vsyncadd [#allocation3], %s186
          %s188 = sshll.u32 [#allocation6], 4
          %s189 = int_to_ptr.vmem [resolvable:$true] %s188
          %194 = dma.hbm_to_vmem [thread:$0]  %s1, 256, %s189, [#allocation3], 128, 128, 8
        $region20: #{tpu_custom_call.1} parent=11 // pred_fallthru
          _
        // Predicated region
        $region21: #{tpu_custom_call.1} parent=11 // pred_check
          %p195 = pneg %p80
        $region22: #{tpu_custom_call.1} parent=11 // pred_check_branch
          %197 = sbr.rel (%p195) target = $region24
        $region23: #{tpu_custom_call.1} parent=11 // pred_region
          %s199 = ssub.s32 128, 128
          %200 = vsyncadd [#allocation8], %s199
          %s202 = sshll.u32 [#allocation7], 4
          %s203 = int_to_ptr.vmem [resolvable:$true] %s202
          %205 = dma.hbm_to_vmem [thread:$0]  %s2, 128, %s203, [#allocation8]
        $region24: #{tpu_custom_call.1} parent=11 // pred_fallthru
          _
      $region12: #{tpu_custom_call.1} parent=5 // pred_fallthru
        _
      %p206 = scmp.lt.s32.totalorder %s17, 2
      // Predicated region
      $region25: #{tpu_custom_call.1} parent=5 // pred_check
        %p207 = pneg %p206
      $region26: #{tpu_custom_call.1} parent=5 // pred_check_branch
        %209 = sbr.rel (%p207) target = $region28
      $region27: #{tpu_custom_call.1} parent=5 // pred_region
        // Predicated region
        $region29: #{tpu_custom_call.1} parent=27 // pred_check
          %p210 = pneg %p100
        $region30: #{tpu_custom_call.1} parent=27 // pred_check_branch
          %212 = sbr.rel (%p210) target = $region32
        $region31: #{tpu_custom_call.1} parent=27 // pred_region
          %s213 = sand.u32 %s17, 1
          %s214 = scalar_lea.sflag [#allocation3], %s213
          %s215 = sand.u32 %s90, 1
          %s216 = smul.addr %s215, 64
          %s217 = scalar_lea.vmem [#allocation9], %s216
          %s219 = ssub.s32 1024, 1024
          %220 = vsyncadd %s214, %s219
          %s221 = smul.addr %s17, 8
          %s222 = smul.addr %s221, 128
          %s223 = scalar_lea.hbm %s3, %s222
          %s224 = sshll.u32 %s217, 4
          %s225 = int_to_ptr.vmem [resolvable:$true] %s224
          %230 = dma.hbm_to_vmem [thread:$0]  %s223, 1024, %s225, %s214, 128, 128, 8
        $region32: #{tpu_custom_call.1} parent=27 // pred_fallthru
          _
        // Predicated region
        $region33: #{tpu_custom_call.1} parent=27 // pred_check
          %p231 = pneg %p126
        $region34: #{tpu_custom_call.1} parent=27 // pred_check_branch
          %233 = sbr.rel (%p231) target = $region36
        $region35: #{tpu_custom_call.1} parent=27 // pred_region
          %s234 = sand.u32 %s17, 1
          %s235 = scalar_lea.sflag [#allocation3], %s234
          %s236 = sand.u32 %s116, 1
          %s237 = smul.addr %s236, 64
          %s238 = scalar_lea.vmem [#allocation10], %s237
          %s240 = ssub.s32 1024, 1024
          %241 = vsyncadd %s235, %s240
          %s242 = smul.addr %s17, 8
          %s243 = smul.addr %s242, 128
          %s244 = scalar_lea.hbm %s4, %s243
          %s245 = sshll.u32 %s238, 4
          %s246 = int_to_ptr.vmem [resolvable:$true] %s245
          %251 = dma.hbm_to_vmem [thread:$0]  %s244, 1024, %s246, %s235, 128, 128, 8
        $region36: #{tpu_custom_call.1} parent=27 // pred_fallthru
          _
      $region28: #{tpu_custom_call.1} parent=5 // pred_fallthru
        _
      %p252 = scmp.le.s32.totalorder 1, %s17
      %p253 = scmp.lt.s32.totalorder %s17, 3
      %p254 = pnand %p252, %p253
      %p255 = pneg %p254
      // Predicated region
      $region37: #{tpu_custom_call.1} parent=5 // pred_check
        _
      $region38: #{tpu_custom_call.1} parent=5 // pred_check_branch
        %257 = sbr.rel (%p254) target = $region40
      $region39: #{tpu_custom_call.1} parent=5 // pred_region
        %s258 = ssub.s32 %s17, 1
        // Predicated region
        $region41: #{tpu_custom_call.1} parent=39 // pred_check
          %p259 = pneg %p38
        $region42: #{tpu_custom_call.1} parent=39 // pred_check_branch
          %261 = sbr.rel (%p259) target = $region44
        $region43: #{tpu_custom_call.1} parent=39 // pred_region
          %262 = dma.done [#allocation5], 16
        $region44: #{tpu_custom_call.1} parent=39 // pred_fallthru
          _
        // Predicated region
        $region45: #{tpu_custom_call.1} parent=39 // pred_check
          %p263 = pneg %p59
        $region46: #{tpu_custom_call.1} parent=39 // pred_check_branch
          %265 = sbr.rel (%p263) target = $region48
        $region47: #{tpu_custom_call.1} parent=39 // pred_region
          %266 = dma.done [#allocation3], 256
        $region48: #{tpu_custom_call.1} parent=39 // pred_fallthru
          _
        // Predicated region
        $region49: #{tpu_custom_call.1} parent=39 // pred_check
          %p267 = pneg %p80
        $region50: #{tpu_custom_call.1} parent=39 // pred_check_branch
          %269 = sbr.rel (%p267) target = $region52
        $region51: #{tpu_custom_call.1} parent=39 // pred_region
          %270 = dma.done [#allocation8], 128
        $region52: #{tpu_custom_call.1} parent=39 // pred_fallthru
          _
        %s271 = sand.u32 %s22, 1
        %s272 = scalar_lea.sflag [#allocation3], %s271
        %s273 = sand.u32 %s93, 1
        %s274 = smul.addr %s273, 64
        %s275 = scalar_lea.vmem [#allocation9], %s274
        // Predicated region
        $region53: #{tpu_custom_call.1} parent=39 // pred_check
          %p276 = pneg %p106
        $region54: #{tpu_custom_call.1} parent=39 // pred_check_branch
          %278 = sbr.rel (%p276) target = $region56
        $region55: #{tpu_custom_call.1} parent=39 // pred_region
          %279 = dma.done %s272, 1024
        $region56: #{tpu_custom_call.1} parent=39 // pred_fallthru
          _
        %s280 = sand.u32 %s22, 1
        %s281 = scalar_lea.sflag [#allocation3], %s280
        %s282 = sand.u32 %s119, 1
        %s283 = smul.addr %s282, 64
        %s284 = scalar_lea.vmem [#allocation10], %s283
        // Predicated region
        $region57: #{tpu_custom_call.1} parent=39 // pred_check
          %p285 = pneg %p132
        $region58: #{tpu_custom_call.1} parent=39 // pred_check_branch
          %287 = sbr.rel (%p285) target = $region60
        $region59: #{tpu_custom_call.1} parent=39 // pred_region
          %288 = dma.done %s281, 1024
        $region60: #{tpu_custom_call.1} parent=39 // pred_fallthru
          _
        %289 = sfence
        %p290 = pneg %p38
        %p291 = pneg %p35
        %p292 = pneg %p59
        %p293 = pneg %p56
        %p294 = pneg %p80
        %p295 = pneg %p77
        %s296 = sand.u32 %s22, 1
        %s297 = scalar_lea.sflag [#allocation3], %s296
        %s298 = sand.u32 %s93, 1
        %s299 = smul.addr %s298, 64
        %s300 = scalar_lea.vmem [#allocation9], %s299
        %p301 = pneg %p106
        %p302 = pneg %p103
        %s303 = sand.u32 %s22, 1
        %s304 = scalar_lea.sflag [#allocation3], %s303
        %s305 = sand.u32 %s119, 1
        %s306 = smul.addr %s305, 64
        %s307 = scalar_lea.vmem [#allocation10], %s306
        %p308 = pneg %p132
        %p309 = pneg %p129
        %p310 = pneg %p158
        %p311 = pneg %p155
        %s312 = sand.u32 %s145, 1
        %s313 = scalar_lea.sflag [#allocation4], %s312
        %s314 = sand.u32 %s145, 1
        %s315 = scalar_lea.vmem [#allocation11], %s314
        %s316 = sld [smem:[#allocation2]]
        %s317 = sld [smem:[#allocation2 + $0x1]]
        %v318 = vld [vmem:[#allocation6] sm:$0xff]
        %v319 = vld [vmem:[#allocation6 + $0x8] sm:$0xff]
        %v320 = vld [vmem:[#allocation7] sm:$0xff]
        %v321 = vld [vmem:[%s275] sm:$0xff]
        %v322 = vld [vmem:[%s275 + $0x8] sm:$0xff]
        %v323 = vld [vmem:[%s275 + $0x10] sm:$0xff]
        %v324 = vld [vmem:[%s275 + $0x18] sm:$0xff]
        %v325 = vld [vmem:[%s275 + $0x20] sm:$0xff]
        %v326 = vld [vmem:[%s275 + $0x28] sm:$0xff]
        %v327 = vld [vmem:[%s275 + $0x30] sm:$0xff]
        %v328 = vld [vmem:[%s275 + $0x38] sm:$0xff]
        %v329 = vld [vmem:[%s284] sm:$0xff]
        %v330 = vld [vmem:[%s284 + $0x8] sm:$0xff]
        %v331 = vld [vmem:[%s284 + $0x10] sm:$0xff]
        %v332 = vld [vmem:[%s284 + $0x18] sm:$0xff]
        %v333 = vld [vmem:[%s284 + $0x20] sm:$0xff]
        %v334 = vld [vmem:[%s284 + $0x28] sm:$0xff]
        %v335 = vld [vmem:[%s284 + $0x30] sm:$0xff]
        %v336 = vld [vmem:[%s284 + $0x38] sm:$0xff]
        %v337 = vmul.f32 %v321, %v321
        %v338 = vmul.f32 %v322, %v322
        %v339 = vmul.f32 %v323, %v323
        %v340 = vmul.f32 %v324, %v324
        %v341 = vmul.f32 %v325, %v325
        %v342 = vmul.f32 %v326, %v326
        %v343 = vmul.f32 %v327, %v327
        %v344 = vmul.f32 %v328, %v328
        %v345 = vmul.f32 %v329, %v329
        %v346 = vmul.f32 %v330, %v330
        %v347 = vmul.f32 %v331, %v331
        %v348 = vmul.f32 %v332, %v332
        %v349 = vmul.f32 %v333, %v333
        %v350 = vmul.f32 %v334, %v334
        %v351 = vmul.f32 %v335, %v335
        %v352 = vmul.f32 %v336, %v336
        %v353 = vmul.f32 %v321, %v329
        %v354 = vmul.f32 %v322, %v330
        %v355 = vmul.f32 %v323, %v331
        %v356 = vmul.f32 %v324, %v332
        %v357 = vmul.f32 %v325, %v333
        %v358 = vmul.f32 %v326, %v334
        %v359 = vmul.f32 %v327, %v335
        %v360 = vmul.f32 %v328, %v336
        %vm361 = vcmask 130048
        %v363 = vsel %vm361, %v321, 0
        %v366 = vsel %vm361, %v322, 0
        %v369 = vsel %vm361, %v323, 0
        %v372 = vsel %vm361, %v324, 0
        %v375 = vsel %vm361, %v325, 0
        %v378 = vsel %vm361, %v326, 0
        %v381 = vsel %vm361, %v327, 0
        %v384 = vsel %vm361, %v328, 0
        %v387 = vsel %vm361, %v329, 0
        %v390 = vsel %vm361, %v330, 0
        %v393 = vsel %vm361, %v331, 0
        %v396 = vsel %vm361, %v332, 0
        %v399 = vsel %vm361, %v333, 0
        %v402 = vsel %vm361, %v334, 0
        %v405 = vsel %vm361, %v335, 0
        %v408 = vsel %vm361, %v336, 0
        %v411 = vsel %vm361, %v337, 0
        %v414 = vsel %vm361, %v338, 0
        %v417 = vsel %vm361, %v339, 0
        %v420 = vsel %vm361, %v340, 0
        %v423 = vsel %vm361, %v341, 0
        %v426 = vsel %vm361, %v342, 0
        %v429 = vsel %vm361, %v343, 0
        %v432 = vsel %vm361, %v344, 0
        %v435 = vsel %vm361, %v345, 0
        %v438 = vsel %vm361, %v346, 0
        %v441 = vsel %vm361, %v347, 0
        %v444 = vsel %vm361, %v348, 0
        %v447 = vsel %vm361, %v349, 0
        %v450 = vsel %vm361, %v350, 0
        %v453 = vsel %vm361, %v351, 0
        %v456 = vsel %vm361, %v352, 0
        %v459 = vsel %vm361, %v353, 0
        %v462 = vsel %vm361, %v354, 0
        %v465 = vsel %vm361, %v355, 0
        %v468 = vsel %vm361, %v356, 0
        %v471 = vsel %vm361, %v357, 0
        %v474 = vsel %vm361, %v358, 0
        %v477 = vsel %vm361, %v359, 0
        %v480 = vsel %vm361, %v360, 0
        %482 = vmatprep.subr.mxu0 0.0
        %483 = vmatpush1.msra.mxu0 %v318
        %484 = vmatprep.subr.mxu0 0.0
        %485 = vmatpush1.msra.mxu0 %v319
        %486 = vmatprep.subr.mxu0 0.0
        %487 = vmatpush1.msra.mxu0 0.0
        %488 = vmatprep.subr.mxu0 0.0
        %489 = vmatpush1.msra.mxu0 0.0
        %490 = vmatprep.subr.mxu0 0.0
        %491 = vmatpush1.msra.mxu0 0.0
        %492 = vmatprep.subr.mxu0 0.0
        %493 = vmatpush1.msra.mxu0 0.0
        %494 = vmatprep.subr.mxu0 0.0
        %495 = vmatpush1.msra.mxu0 0.0
        %496 = vmatprep.subr.mxu0 0.0
        %497 = vmatpush1.msra.mxu0 0.0
        %498 = vmatprep.subr.mxu0 0.0
        %499 = vmatpush1.msra.mxu0 0.0
        %500 = vmatprep.subr.mxu0 0.0
        %501 = vmatpush1.msra.mxu0 0.0
        %502 = vmatprep.subr.mxu0 0.0
        %503 = vmatpush1.msra.mxu0 0.0
        %504 = vmatprep.subr.mxu0 0.0
        %505 = vmatpush1.msra.mxu0 0.0
        %506 = vmatprep.subr.mxu0 0.0
        %507 = vmatpush1.msra.mxu0 0.0
        %508 = vmatprep.subr.mxu0 0.0
        %509 = vmatpush1.msra.mxu0 0.0
        %510 = vmatprep.subr.mxu0 0.0
        %511 = vmatpush1.msra.mxu0 0.0
        %512 = vmatprep.subr.mxu0 0.0
        %513 = vmatpush1.msra.mxu0 0.0
        %514 = vmatprep.subr.mxu0 0.0
        %515 = vmatpush1.msra.mxu0 0.0
        %516 = vmatprep.subr.mxu0 0.0
        %517 = vmatpush1.msra.mxu0 0.0
        %518 = vmatprep.subr.mxu0 0.0
        %519 = vmatpush1.msra.mxu0 0.0
        %520 = vmatprep.subr.mxu0 0.0
        %521 = vmatpush1.msra.mxu0 0.0
        %522 = vmatprep.subr.mxu0 0.0
        %523 = vmatpush1.msra.mxu0 0.0
        %524 = vmatprep.subr.mxu0 0.0
        %525 = vmatpush1.msra.mxu0 0.0
        %526 = vmatprep.subr.mxu0 0.0
        %527 = vmatpush1.msra.mxu0 0.0
        %528 = vmatprep.subr.mxu0 0.0
        %529 = vmatpush1.msra.mxu0 0.0
        %530 = vmatprep.subr.mxu0 0.0
        %531 = vmatpush1.msra.mxu0 0.0
        %532 = vmatprep.subr.mxu0 0.0
        %533 = vmatpush1.msra.mxu0 0.0
        %534 = vmatprep.subr.mxu0 0.0
        %535 = vmatpush1.msra.mxu0 0.0
        %536 = vmatprep.subr.mxu0 0.0
        %537 = vmatpush1.msra.mxu0 0.0
        %538 = vmatprep.subr.mxu0 0.0
        %539 = vmatpush1.msra.mxu0 0.0
        %540 = vmatprep.subr.mxu0 0.0
        %541 = vmatpush1.msra.mxu0 0.0
        %542 = vmatprep.subr.mxu0 0.0
        %543 = vmatpush1.msra.mxu0 0.0
        %544 = vmatprep.subr.mxu0 0.0
        %545 = vmatpush1.msra.mxu0 0.0
        %546 = vmatprep.mubr.f32.mxu0 0.0
        %547 = vmatmul.mubr.f32.gmra.mrb[0].mxu0 %v363
        %v548 = vpop.f32.mrb[0].mxu0
        %v549 = vadd.f32 0.0, %v548
        %v550 = vpop.f32.mrb[0].mxu0
        %551 = vmatprep.mubr.f32.mxu0 0.0
        %552 = vmatmul.mubr.f32.gmra.mrb[0].mxu0 %v366
        %v553 = vpop.f32.mrb[0].mxu0
        %v554 = vadd.f32 0.0, %v553
        %v555 = vpop.f32.mrb[0].mxu0
        %556 = vmatprep.mubr.f32.mxu0 0.0
        %557 = vmatmul.mubr.f32.gmra.mrb[0].mxu0 %v369
        %v558 = vpop.f32.mrb[0].mxu0
        %v559 = vadd.f32 0.0, %v558
        %v560 = vpop.f32.mrb[0].mxu0
        %561 = vmatprep.mubr.f32.mxu0 0.0
        %562 = vmatmul.mubr.f32.gmra.mrb[0].mxu0 %v372
        %v563 = vpop.f32.mrb[0].mxu0
        %v564 = vadd.f32 0.0, %v563
        %v565 = vpop.f32.mrb[0].mxu0
        %566 = vmatprep.mubr.f32.mxu0 0.0
        %567 = vmatmul.mubr.f32.gmra.mrb[0].mxu0 %v375
        %v568 = vpop.f32.mrb[0].mxu0
        %v569 = vadd.f32 0.0, %v568
        %v570 = vpop.f32.mrb[0].mxu0
        %571 = vmatprep.mubr.f32.mxu0 0.0
        %572 = vmatmul.mubr.f32.gmra.mrb[0].mxu0 %v378
        %v573 = vpop.f32.mrb[0].mxu0
        %v574 = vadd.f32 0.0, %v573
        %v575 = vpop.f32.mrb[0].mxu0
        %576 = vmatprep.mubr.f32.mxu0 0.0
        %577 = vmatmul.mubr.f32.gmra.mrb[0].mxu0 %v381
        %v578 = vpop.f32.mrb[0].mxu0
        %v579 = vadd.f32 0.0, %v578
        %v580 = vpop.f32.mrb[0].mxu0
        %581 = vmatprep.mubr.f32.mxu0 0.0
        %582 = vmatmul.mubr.f32.gmra.mrb[0].mxu0 %v384
        %v583 = vpop.f32.mrb[0].mxu0
        %v584 = vadd.f32 0.0, %v583
        %v585 = vpop.f32.mrb[0].mxu0
        %586 = vmatprep.mubr.f32.mxu0 0.0
        %587 = vmatmul.mubr.f32.gmra.mrb[0].mxu0 %v387
        %v588 = vpop.f32.mrb[0].mxu0
        %v589 = vadd.f32 0.0, %v588
        %v590 = vpop.f32.mrb[0].mxu0
        %591 = vmatprep.mubr.f32.mxu0 0.0
        %592 = vmatmul.mubr.f32.gmra.mrb[0].mxu0 %v390
        %v593 = vpop.f32.mrb[0].mxu0
        %v594 = vadd.f32 0.0, %v593
        %v595 = vpop.f32.mrb[0].mxu0
        %596 = vmatprep.mubr.f32.mxu0 0.0
        %597 = vmatmul.mubr.f32.gmra.mrb[0].mxu0 %v393
        %v598 = vpop.f32.mrb[0].mxu0
        %v599 = vadd.f32 0.0, %v598
        %v600 = vpop.f32.mrb[0].mxu0
        %601 = vmatprep.mubr.f32.mxu0 0.0
        %602 = vmatmul.mubr.f32.gmra.mrb[0].mxu0 %v396
        %v603 = vpop.f32.mrb[0].mxu0
        %v604 = vadd.f32 0.0, %v603
        %v605 = vpop.f32.mrb[0].mxu0
        %606 = vmatprep.mubr.f32.mxu0 0.0
        %607 = vmatmul.mubr.f32.gmra.mrb[0].mxu0 %v399
        %v608 = vpop.f32.mrb[0].mxu0
        %v609 = vadd.f32 0.0, %v608
        %v610 = vpop.f32.mrb[0].mxu0
        %611 = vmatprep.mubr.f32.mxu0 0.0
        %612 = vmatmul.mubr.f32.gmra.mrb[0].mxu0 %v402
        %v613 = vpop.f32.mrb[0].mxu0
        %v614 = vadd.f32 0.0, %v613
        %v615 = vpop.f32.mrb[0].mxu0
        %616 = vmatprep.mubr.f32.mxu0 0.0
        %617 = vmatmul.mubr.f32.gmra.mrb[0].mxu0 %v405
        %v618 = vpop.f32.mrb[0].mxu0
        %v619 = vadd.f32 0.0, %v618
        %v620 = vpop.f32.mrb[0].mxu0
        %621 = vmatprep.mubr.f32.mxu0 0.0
        %622 = vmatmul.mubr.f32.gmra.mrb[0].mxu0 %v408
        %v623 = vpop.f32.mrb[0].mxu0
        %v624 = vadd.f32 0.0, %v623
        %v625 = vpop.f32.mrb[0].mxu0
        %626 = vmatprep.mubr.f32.mxu0 0.0
        %627 = vmatmul.mubr.f32.gmra.mrb[0].mxu0 %v411
        %v628 = vpop.f32.mrb[0].mxu0
        %v629 = vadd.f32 0.0, %v628
        %v630 = vpop.f32.mrb[0].mxu0
        %631 = vmatprep.mubr.f32.mxu0 0.0
        %632 = vmatmul.mubr.f32.gmra.mrb[0].mxu0 %v414
        %v633 = vpop.f32.mrb[0].mxu0
        %v634 = vadd.f32 0.0, %v633
        %v635 = vpop.f32.mrb[0].mxu0
        %636 = vmatprep.mubr.f32.mxu0 0.0
        %637 = vmatmul.mubr.f32.gmra.mrb[0].mxu0 %v417
        %v638 = vpop.f32.mrb[0].mxu0
        %v639 = vadd.f32 0.0, %v638
        %v640 = vpop.f32.mrb[0].mxu0
        %641 = vmatprep.mubr.f32.mxu0 0.0
        %642 = vmatmul.mubr.f32.gmra.mrb[0].mxu0 %v420
        %v643 = vpop.f32.mrb[0].mxu0
        %v644 = vadd.f32 0.0, %v643
        %v645 = vpop.f32.mrb[0].mxu0
        %646 = vmatprep.mubr.f32.mxu0 0.0
        %647 = vmatmul.mubr.f32.gmra.mrb[0].mxu0 %v423
        %v648 = vpop.f32.mrb[0].mxu0
        %v649 = vadd.f32 0.0, %v648
        %v650 = vpop.f32.mrb[0].mxu0
        %651 = vmatprep.mubr.f32.mxu0 0.0
        %652 = vmatmul.mubr.f32.gmra.mrb[0].mxu0 %v426
        %v653 = vpop.f32.mrb[0].mxu0
        %v654 = vadd.f32 0.0, %v653
        %v655 = vpop.f32.mrb[0].mxu0
        %656 = vmatprep.mubr.f32.mxu0 0.0
        %657 = vmatmul.mubr.f32.gmra.mrb[0].mxu0 %v429
        %v658 = vpop.f32.mrb[0].mxu0
        %v659 = vadd.f32 0.0, %v658
        %v660 = vpop.f32.mrb[0].mxu0
        %661 = vmatprep.mubr.f32.mxu0 0.0
        %662 = vmatmul.mubr.f32.gmra.mrb[0].mxu0 %v432
        %v663 = vpop.f32.mrb[0].mxu0
        %v664 = vadd.f32 0.0, %v663
        %v665 = vpop.f32.mrb[0].mxu0
        %666 = vmatprep.mubr.f32.mxu0 0.0
        %667 = vmatmul.mubr.f32.gmra.mrb[0].mxu0 %v435
        %v668 = vpop.f32.mrb[0].mxu0
        %v669 = vadd.f32 0.0, %v668
        %v670 = vpop.f32.mrb[0].mxu0
        %671 = vmatprep.mubr.f32.mxu0 0.0
        %672 = vmatmul.mubr.f32.gmra.mrb[0].mxu0 %v438
        %v673 = vpop.f32.mrb[0].mxu0
        %v674 = vadd.f32 0.0, %v673
        %v675 = vpop.f32.mrb[0].mxu0
        %676 = vmatprep.mubr.f32.mxu0 0.0
        %677 = vmatmul.mubr.f32.gmra.mrb[0].mxu0 %v441
        %v678 = vpop.f32.mrb[0].mxu0
        %v679 = vadd.f32 0.0, %v678
        %v680 = vpop.f32.mrb[0].mxu0
        %681 = vmatprep.mubr.f32.mxu0 0.0
        %682 = vmatmul.mubr.f32.gmra.mrb[0].mxu0 %v444
        %v683 = vpop.f32.mrb[0].mxu0
        %v684 = vadd.f32 0.0, %v683
        %v685 = vpop.f32.mrb[0].mxu0
        %686 = vmatprep.mubr.f32.mxu0 0.0
        %687 = vmatmul.mubr.f32.gmra.mrb[0].mxu0 %v447
        %v688 = vpop.f32.mrb[0].mxu0
        %v689 = vadd.f32 0.0, %v688
        %v690 = vpop.f32.mrb[0].mxu0
        %691 = vmatprep.mubr.f32.mxu0 0.0
        %692 = vmatmul.mubr.f32.gmra.mrb[0].mxu0 %v450
        %v693 = vpop.f32.mrb[0].mxu0
        %v694 = vadd.f32 0.0, %v693
        %v695 = vpop.f32.mrb[0].mxu0
        %696 = vmatprep.mubr.f32.mxu0 0.0
        %697 = vmatmul.mubr.f32.gmra.mrb[0].mxu0 %v453
        %v698 = vpop.f32.mrb[0].mxu0
        %v699 = vadd.f32 0.0, %v698
        %v700 = vpop.f32.mrb[0].mxu0
        %701 = vmatprep.mubr.f32.mxu0 0.0
        %702 = vmatmul.mubr.f32.gmra.mrb[0].mxu0 %v456
        %v703 = vpop.f32.mrb[0].mxu0
        %v704 = vadd.f32 0.0, %v703
        %v705 = vpop.f32.mrb[0].mxu0
        %706 = vmatprep.mubr.f32.mxu0 0.0
        %707 = vmatmul.mubr.f32.gmra.mrb[0].mxu0 %v459
        %v708 = vpop.f32.mrb[0].mxu0
        %v709 = vadd.f32 0.0, %v708
        %v710 = vpop.f32.mrb[0].mxu0
        %711 = vmatprep.mubr.f32.mxu0 0.0
        %712 = vmatmul.mubr.f32.gmra.mrb[0].mxu0 %v462
        %v713 = vpop.f32.mrb[0].mxu0
        %v714 = vadd.f32 0.0, %v713
        %v715 = vpop.f32.mrb[0].mxu0
        %716 = vmatprep.mubr.f32.mxu0 0.0
        %717 = vmatmul.mubr.f32.gmra.mrb[0].mxu0 %v465
        %v718 = vpop.f32.mrb[0].mxu0
        %v719 = vadd.f32 0.0, %v718
        %v720 = vpop.f32.mrb[0].mxu0
        %721 = vmatprep.mubr.f32.mxu0 0.0
        %722 = vmatmul.mubr.f32.gmra.mrb[0].mxu0 %v468
        %v723 = vpop.f32.mrb[0].mxu0
        %v724 = vadd.f32 0.0, %v723
        %v725 = vpop.f32.mrb[0].mxu0
        %726 = vmatprep.mubr.f32.mxu0 0.0
        %727 = vmatmul.mubr.f32.gmra.mrb[0].mxu0 %v471
        %v728 = vpop.f32.mrb[0].mxu0
        %v729 = vadd.f32 0.0, %v728
        %v730 = vpop.f32.mrb[0].mxu0
        %731 = vmatprep.mubr.f32.mxu0 0.0
        %732 = vmatmul.mubr.f32.gmra.mrb[0].mxu0 %v474
        %v733 = vpop.f32.mrb[0].mxu0
        %v734 = vadd.f32 0.0, %v733
        %v735 = vpop.f32.mrb[0].mxu0
        %736 = vmatprep.mubr.f32.mxu0 0.0
        %737 = vmatmul.mubr.f32.gmra.mrb[0].mxu0 %v477
        %v738 = vpop.f32.mrb[0].mxu0
        %v739 = vadd.f32 0.0, %v738
        %v740 = vpop.f32.mrb[0].mxu0
        %741 = vmatprep.mubr.f32.mxu0 0.0
        %742 = vmatmul.mubr.f32.gmra.mrb[0].mxu0 %v480
        %v743 = vpop.f32.mrb[0].mxu0
        %v744 = vadd.f32 0.0, %v743
        %v745 = vpop.f32.mrb[0].mxu0
        %746 = vdwg.mxu0
        %v748 = vsel %vm361, %v320, 0
        %750 = vmatprep.subr.mxu0 0.0
        %751 = vmatpush1.msra.mxu0 %v549
        %752 = vmatprep.subr.mxu0 0.0
        %753 = vmatpush1.msra.mxu0 %v554
        %754 = vmatprep.subr.mxu0 0.0
        %755 = vmatpush1.msra.mxu0 0.0
        %756 = vmatprep.subr.mxu0 0.0
        %757 = vmatpush1.msra.mxu0 0.0
        %758 = vmatprep.subr.mxu0 0.0
        %759 = vmatpush1.msra.mxu0 0.0
        %760 = vmatprep.subr.mxu0 0.0
        %761 = vmatpush1.msra.mxu0 0.0
        %762 = vmatprep.subr.mxu0 0.0
        %763 = vmatpush1.msra.mxu0 0.0
        %764 = vmatprep.subr.mxu0 0.0
        %765 = vmatpush1.msra.mxu0 0.0
        %766 = vmatprep.subr.mxu0 0.0
        %767 = vmatpush1.msra.mxu0 0.0
        %768 = vmatprep.subr.mxu0 0.0
        %769 = vmatpush1.msra.mxu0 0.0
        %770 = vmatprep.subr.mxu0 0.0
        %771 = vmatpush1.msra.mxu0 0.0
        %772 = vmatprep.subr.mxu0 0.0
        %773 = vmatpush1.msra.mxu0 0.0
        %774 = vmatprep.subr.mxu0 0.0
        %775 = vmatpush1.msra.mxu0 0.0
        %776 = vmatprep.subr.mxu0 0.0
        %777 = vmatpush1.msra.mxu0 0.0
        %778 = vmatprep.subr.mxu0 0.0
        %779 = vmatpush1.msra.mxu0 0.0
        %780 = vmatprep.subr.mxu0 0.0
        %781 = vmatpush1.msra.mxu0 0.0
        %782 = vmatprep.subr.mxu0 0.0
        %783 = vmatpush1.msra.mxu0 0.0
        %784 = vmatprep.subr.mxu0 0.0
        %785 = vmatpush1.msra.mxu0 0.0
        %786 = vmatprep.subr.mxu0 0.0
        %787 = vmatpush1.msra.mxu0 0.0
        %788 = vmatprep.subr.mxu0 0.0
        %789 = vmatpush1.msra.mxu0 0.0
        %790 = vmatprep.subr.mxu0 0.0
        %791 = vmatpush1.msra.mxu0 0.0
        %792 = vmatprep.subr.mxu0 0.0
        %793 = vmatpush1.msra.mxu0 0.0
        %794 = vmatprep.subr.mxu0 0.0
        %795 = vmatpush1.msra.mxu0 0.0
        %796 = vmatprep.subr.mxu0 0.0
        %797 = vmatpush1.msra.mxu0 0.0
        %798 = vmatprep.subr.mxu0 0.0
        %799 = vmatpush1.msra.mxu0 0.0
        %800 = vmatprep.subr.mxu0 0.0
        %801 = vmatpush1.msra.mxu0 0.0
        %802 = vmatprep.subr.mxu0 0.0
        %803 = vmatpush1.msra.mxu0 0.0
        %804 = vmatprep.subr.mxu0 0.0
        %805 = vmatpush1.msra.mxu0 0.0
        %806 = vmatprep.subr.mxu0 0.0
        %807 = vmatpush1.msra.mxu0 0.0
        %808 = vmatprep.subr.mxu0 0.0
        %809 = vmatpush1.msra.mxu0 0.0
        %810 = vmatprep.subr.mxu0 0.0
        %811 = vmatpush1.msra.mxu0 0.0
        %812 = vmatprep.subr.mxu0 0.0
        %813 = vmatpush1.msra.mxu0 0.0
        %814 = vmatprep.mubr.f32.mxu0 0.0
        %815 = vmatmul.mubr.f32.gmra.mrb[0].mxu0 %v748
        %v816 = vpop.f32.mrb[0].mxu0
        %v817 = vadd.f32 0.0, %v816
        %v818 = vpop.f32.mrb[0].mxu0
        %819 = vdwg.mxu0
        %820 = vmatprep.subr.mxu0 0.0
        %821 = vmatpush1.msra.mxu0 %v559
        %822 = vmatprep.subr.mxu0 0.0
        %823 = vmatpush1.msra.mxu0 %v564
        %824 = vmatprep.subr.mxu0 0.0
        %825 = vmatpush1.msra.mxu0 0.0
        %826 = vmatprep.subr.mxu0 0.0
        %827 = vmatpush1.msra.mxu0 0.0
        %828 = vmatprep.subr.mxu0 0.0
        %829 = vmatpush1.msra.mxu0 0.0
        %830 = vmatprep.subr.mxu0 0.0
        %831 = vmatpush1.msra.mxu0 0.0
        %832 = vmatprep.subr.mxu0 0.0
        %833 = vmatpush1.msra.mxu0 0.0
        %834 = vmatprep.subr.mxu0 0.0
        %835 = vmatpush1.msra.mxu0 0.0
        %836 = vmatprep.subr.mxu0 0.0
        %837 = vmatpush1.msra.mxu0 0.0
        %838 = vmatprep.subr.mxu0 0.0
        %839 = vmatpush1.msra.mxu0 0.0
        %840 = vmatprep.subr.mxu0 0.0
        %841 = vmatpush1.msra.mxu0 0.0
        %842 = vmatprep.subr.mxu0 0.0
        %843 = vmatpush1.msra.mxu0 0.0
        %844 = vmatprep.subr.mxu0 0.0
        %845 = vmatpush1.msra.mxu0 0.0
        %846 = vmatprep.subr.mxu0 0.0
        %847 = vmatpush1.msra.mxu0 0.0
        %848 = vmatprep.subr.mxu0 0.0
        %849 = vmatpush1.msra.mxu0 0.0
        %850 = vmatprep.subr.mxu0 0.0
        %851 = vmatpush1.msra.mxu0 0.0
        %852 = vmatprep.subr.mxu0 0.0
        %853 = vmatpush1.msra.mxu0 0.0
        %854 = vmatprep.subr.mxu0 0.0
        %855 = vmatpush1.msra.mxu0 0.0
        %856 = vmatprep.subr.mxu0 0.0
        %857 = vmatpush1.msra.mxu0 0.0
        %858 = vmatprep.subr.mxu0 0.0
        %859 = vmatpush1.msra.mxu0 0.0
        %860 = vmatprep.subr.mxu0 0.0
        %861 = vmatpush1.msra.mxu0 0.0
        %862 = vmatprep.subr.mxu0 0.0
        %863 = vmatpush1.msra.mxu0 0.0
        %864 = vmatprep.subr.mxu0 0.0
        %865 = vmatpush1.msra.mxu0 0.0
        %866 = vmatprep.subr.mxu0 0.0
        %867 = vmatpush1.msra.mxu0 0.0
        %868 = vmatprep.subr.mxu0 0.0
        %869 = vmatpush1.msra.mxu0 0.0
        %870 = vmatprep.subr.mxu0 0.0
        %871 = vmatpush1.msra.mxu0 0.0
        %872 = vmatprep.subr.mxu0 0.0
        %873 = vmatpush1.msra.mxu0 0.0
        %874 = vmatprep.subr.mxu0 0.0
        %875 = vmatpush1.msra.mxu0 0.0
        %876 = vmatprep.subr.mxu0 0.0
        %877 = vmatpush1.msra.mxu0 0.0
        %878 = vmatprep.subr.mxu0 0.0
        %879 = vmatpush1.msra.mxu0 0.0
        %880 = vmatprep.subr.mxu0 0.0
        %881 = vmatpush1.msra.mxu0 0.0
        %882 = vmatprep.subr.mxu0 0.0
        %883 = vmatpush1.msra.mxu0 0.0
        %884 = vmatprep.mubr.f32.mxu0 0.0
        %885 = vmatmul.mubr.f32.gmra.mrb[0].mxu0 %v748
        %v886 = vpop.f32.mrb[0].mxu0
        %v887 = vadd.f32 0.0, %v886
        %v888 = vpop.f32.mrb[0].mxu0
        %889 = vdwg.mxu0
        %890 = vmatprep.subr.mxu0 0.0
        %891 = vmatpush1.msra.mxu0 %v569
        %892 = vmatprep.subr.mxu0 0.0
        %893 = vmatpush1.msra.mxu0 %v574
        %894 = vmatprep.subr.mxu0 0.0
        %895 = vmatpush1.msra.mxu0 0.0
        %896 = vmatprep.subr.mxu0 0.0
        %897 = vmatpush1.msra.mxu0 0.0
        %898 = vmatprep.subr.mxu0 0.0
        %899 = vmatpush1.msra.mxu0 0.0
        %900 = vmatprep.subr.mxu0 0.0
        %901 = vmatpush1.msra.mxu0 0.0
        %902 = vmatprep.subr.mxu0 0.0
        %903 = vmatpush1.msra.mxu0 0.0
        %904 = vmatprep.subr.mxu0 0.0
        %905 = vmatpush1.msra.mxu0 0.0
        %906 = vmatprep.subr.mxu0 0.0
        %907 = vmatpush1.msra.mxu0 0.0
        %908 = vmatprep.subr.mxu0 0.0
        %909 = vmatpush1.msra.mxu0 0.0
        %910 = vmatprep.subr.mxu0 0.0
        %911 = vmatpush1.msra.mxu0 0.0
        %912 = vmatprep.subr.mxu0 0.0
        %913 = vmatpush1.msra.mxu0 0.0
        %914 = vmatprep.subr.mxu0 0.0
        %915 = vmatpush1.msra.mxu0 0.0
        %916 = vmatprep.subr.mxu0 0.0
        %917 = vmatpush1.msra.mxu0 0.0
        %918 = vmatprep.subr.mxu0 0.0
        %919 = vmatpush1.msra.mxu0 0.0
        %920 = vmatprep.subr.mxu0 0.0
        %921 = vmatpush1.msra.mxu0 0.0
        %922 = vmatprep.subr.mxu0 0.0
        %923 = vmatpush1.msra.mxu0 0.0
        %924 = vmatprep.subr.mxu0 0.0
        %925 = vmatpush1.msra.mxu0 0.0
        %926 = vmatprep.subr.mxu0 0.0
        %927 = vmatpush1.msra.mxu0 0.0
        %928 = vmatprep.subr.mxu0 0.0
        %929 = vmatpush1.msra.mxu0 0.0
        %930 = vmatprep.subr.mxu0 0.0
        %931 = vmatpush1.msra.mxu0 0.0
        %932 = vmatprep.subr.mxu0 0.0
        %933 = vmatpush1.msra.mxu0 0.0
        %934 = vmatprep.subr.mxu0 0.0
        %935 = vmatpush1.msra.mxu0 0.0
        %936 = vmatprep.subr.mxu0 0.0
        %937 = vmatpush1.msra.mxu0 0.0
        %938 = vmatprep.subr.mxu0 0.0
        %939 = vmatpush1.msra.mxu0 0.0
        %940 = vmatprep.subr.mxu0 0.0
        %941 = vmatpush1.msra.mxu0 0.0
        %942 = vmatprep.subr.mxu0 0.0
        %943 = vmatpush1.msra.mxu0 0.0
        %944 = vmatprep.subr.mxu0 0.0
        %945 = vmatpush1.msra.mxu0 0.0
        %946 = vmatprep.subr.mxu0 0.0
        %947 = vmatpush1.msra.mxu0 0.0
        %948 = vmatprep.subr.mxu0 0.0
        %949 = vmatpush1.msra.mxu0 0.0
        %950 = vmatprep.subr.mxu0 0.0
        %951 = vmatpush1.msra.mxu0 0.0
        %952 = vmatprep.subr.mxu0 0.0
        %953 = vmatpush1.msra.mxu0 0.0
        %954 = vmatprep.mubr.f32.mxu0 0.0
        %955 = vmatmul.mubr.f32.gmra.mrb[0].mxu0 %v748
        %v956 = vpop.f32.mrb[0].mxu0
        %v957 = vadd.f32 0.0, %v956
        %v958 = vpop.f32.mrb[0].mxu0
        %959 = vdwg.mxu0
        %960 = vmatprep.subr.mxu0 0.0
        %961 = vmatpush1.msra.mxu0 %v579
        %962 = vmatprep.subr.mxu0 0.0
        %963 = vmatpush1.msra.mxu0 %v584
        %964 = vmatprep.subr.mxu0 0.0
        %965 = vmatpush1.msra.mxu0 0.0
        %966 = vmatprep.subr.mxu0 0.0
        %967 = vmatpush1.msra.mxu0 0.0
        %968 = vmatprep.subr.mxu0 0.0
        %969 = vmatpush1.msra.mxu0 0.0
        %970 = vmatprep.subr.mxu0 0.0
        %971 = vmatpush1.msra.mxu0 0.0
        %972 = vmatprep.subr.mxu0 0.0
        %973 = vmatpush1.msra.mxu0 0.0
        %974 = vmatprep.subr.mxu0 0.0
        %975 = vmatpush1.msra.mxu0 0.0
        %976 = vmatprep.subr.mxu0 0.0
        %977 = vmatpush1.msra.mxu0 0.0
        %978 = vmatprep.subr.mxu0 0.0
        %979 = vmatpush1.msra.mxu0 0.0
        %980 = vmatprep.subr.mxu0 0.0
        %981 = vmatpush1.msra.mxu0 0.0
        %982 = vmatprep.subr.mxu0 0.0
        %983 = vmatpush1.msra.mxu0 0.0
        %984 = vmatprep.subr.mxu0 0.0
        %985 = vmatpush1.msra.mxu0 0.0
        %986 = vmatprep.subr.mxu0 0.0
        %987 = vmatpush1.msra.mxu0 0.0
        %988 = vmatprep.subr.mxu0 0.0
        %989 = vmatpush1.msra.mxu0 0.0
        %990 = vmatprep.subr.mxu0 0.0
        %991 = vmatpush1.msra.mxu0 0.0
        %992 = vmatprep.subr.mxu0 0.0
        %993 = vmatpush1.msra.mxu0 0.0
        %994 = vmatprep.subr.mxu0 0.0
        %995 = vmatpush1.msra.mxu0 0.0
        %996 = vmatprep.subr.mxu0 0.0
        %997 = vmatpush1.msra.mxu0 0.0
        %998 = vmatprep.subr.mxu0 0.0
        %999 = vmatpush1.msra.mxu0 0.0
        %1000 = vmatprep.subr.mxu0 0.0
        %1001 = vmatpush1.msra.mxu0 0.0
        %1002 = vmatprep.subr.mxu0 0.0
        %1003 = vmatpush1.msra.mxu0 0.0
        %1004 = vmatprep.subr.mxu0 0.0
        %1005 = vmatpush1.msra.mxu0 0.0
        %1006 = vmatprep.subr.mxu0 0.0
        %1007 = vmatpush1.msra.mxu0 0.0
        %1008 = vmatprep.subr.mxu0 0.0
        %1009 = vmatpush1.msra.mxu0 0.0
        %1010 = vmatprep.subr.mxu0 0.0
        %1011 = vmatpush1.msra.mxu0 0.0
        %1012 = vmatprep.subr.mxu0 0.0
        %1013 = vmatpush1.msra.mxu0 0.0
        %1014 = vmatprep.subr.mxu0 0.0
        %1015 = vmatpush1.msra.mxu0 0.0
        %1016 = vmatprep.subr.mxu0 0.0
        %1017 = vmatpush1.msra.mxu0 0.0
        %1018 = vmatprep.subr.mxu0 0.0
        %1019 = vmatpush1.msra.mxu0 0.0
        %1020 = vmatprep.subr.mxu0 0.0
        %1021 = vmatpush1.msra.mxu0 0.0
        %1022 = vmatprep.subr.mxu0 0.0
        %1023 = vmatpush1.msra.mxu0 0.0
        %1024 = vmatprep.mubr.f32.mxu0 0.0
        %1025 = vmatmul.mubr.f32.gmra.mrb[0].mxu0 %v748
        %v1026 = vpop.f32.mrb[0].mxu0
        %v1027 = vadd.f32 0.0, %v1026
        %v1028 = vpop.f32.mrb[0].mxu0
        %1029 = vdwg.mxu0
        %1030 = vmatprep.subr.mxu0 0.0
        %1031 = vmatpush1.msra.mxu0 %v589
        %1032 = vmatprep.subr.mxu0 0.0
        %1033 = vmatpush1.msra.mxu0 %v594
        %1034 = vmatprep.subr.mxu0 0.0
        %1035 = vmatpush1.msra.mxu0 0.0
        %1036 = vmatprep.subr.mxu0 0.0
        %1037 = vmatpush1.msra.mxu0 0.0
        %1038 = vmatprep.subr.mxu0 0.0
        %1039 = vmatpush1.msra.mxu0 0.0
        %1040 = vmatprep.subr.mxu0 0.0
        %1041 = vmatpush1.msra.mxu0 0.0
        %1042 = vmatprep.subr.mxu0 0.0
        %1043 = vmatpush1.msra.mxu0 0.0
        %1044 = vmatprep.subr.mxu0 0.0
        %1045 = vmatpush1.msra.mxu0 0.0
        %1046 = vmatprep.subr.mxu0 0.0
        %1047 = vmatpush1.msra.mxu0 0.0
        %1048 = vmatprep.subr.mxu0 0.0
        %1049 = vmatpush1.msra.mxu0 0.0
        %1050 = vmatprep.subr.mxu0 0.0
        %1051 = vmatpush1.msra.mxu0 0.0
        %1052 = vmatprep.subr.mxu0 0.0
        %1053 = vmatpush1.msra.mxu0 0.0
        %1054 = vmatprep.subr.mxu0 0.0
        %1055 = vmatpush1.msra.mxu0 0.0
        %1056 = vmatprep.subr.mxu0 0.0
        %1057 = vmatpush1.msra.mxu0 0.0
        %1058 = vmatprep.subr.mxu0 0.0
        %1059 = vmatpush1.msra.mxu0 0.0
        %1060 = vmatprep.subr.mxu0 0.0
        %1061 = vmatpush1.msra.mxu0 0.0
        %1062 = vmatprep.subr.mxu0 0.0
        %1063 = vmatpush1.msra.mxu0 0.0
        %1064 = vmatprep.subr.mxu0 0.0
        %1065 = vmatpush1.msra.mxu0 0.0
        %1066 = vmatprep.subr.mxu0 0.0
        %1067 = vmatpush1.msra.mxu0 0.0
        %1068 = vmatprep.subr.mxu0 0.0
        %1069 = vmatpush1.msra.mxu0 0.0
        %1070 = vmatprep.subr.mxu0 0.0
        %1071 = vmatpush1.msra.mxu0 0.0
        %1072 = vmatprep.subr.mxu0 0.0
        %1073 = vmatpush1.msra.mxu0 0.0
        %1074 = vmatprep.subr.mxu0 0.0
        %1075 = vmatpush1.msra.mxu0 0.0
        %1076 = vmatprep.subr.mxu0 0.0
        %1077 = vmatpush1.msra.mxu0 0.0
        %1078 = vmatprep.subr.mxu0 0.0
        %1079 = vmatpush1.msra.mxu0 0.0
        %1080 = vmatprep.subr.mxu0 0.0
        %1081 = vmatpush1.msra.mxu0 0.0
        %1082 = vmatprep.subr.mxu0 0.0
        %1083 = vmatpush1.msra.mxu0 0.0
        %1084 = vmatprep.subr.mxu0 0.0
        %1085 = vmatpush1.msra.mxu0 0.0
        %1086 = vmatprep.subr.mxu0 0.0
        %1087 = vmatpush1.msra.mxu0 0.0
        %1088 = vmatprep.subr.mxu0 0.0
        %1089 = vmatpush1.msra.mxu0 0.0
        %1090 = vmatprep.subr.mxu0 0.0
        %1091 = vmatpush1.msra.mxu0 0.0
        %1092 = vmatprep.subr.mxu0 0.0
        %1093 = vmatpush1.msra.mxu0 0.0
        %1094 = vmatprep.mubr.f32.mxu0 0.0
        %1095 = vmatmul.mubr.f32.gmra.mrb[0].mxu0 %v748
        %v1096 = vpop.f32.mrb[0].mxu0
        %v1097 = vadd.f32 0.0, %v1096
        %v1098 = vpop.f32.mrb[0].mxu0
        %1099 = vdwg.mxu0
        %1100 = vmatprep.subr.mxu0 0.0
        %1101 = vmatpush1.msra.mxu0 %v599
        %1102 = vmatprep.subr.mxu0 0.0
        %1103 = vmatpush1.msra.mxu0 %v604
        %1104 = vmatprep.subr.mxu0 0.0
        %1105 = vmatpush1.msra.mxu0 0.0
        %1106 = vmatprep.subr.mxu0 0.0
        %1107 = vmatpush1.msra.mxu0 0.0
        %1108 = vmatprep.subr.mxu0 0.0
        %1109 = vmatpush1.msra.mxu0 0.0
        %1110 = vmatprep.subr.mxu0 0.0
        %1111 = vmatpush1.msra.mxu0 0.0
        %1112 = vmatprep.subr.mxu0 0.0
        %1113 = vmatpush1.msra.mxu0 0.0
        %1114 = vmatprep.subr.mxu0 0.0
        %1115 = vmatpush1.msra.mxu0 0.0
        %1116 = vmatprep.subr.mxu0 0.0
        %1117 = vmatpush1.msra.mxu0 0.0
        %1118 = vmatprep.subr.mxu0 0.0
        %1119 = vmatpush1.msra.mxu0 0.0
        %1120 = vmatprep.subr.mxu0 0.0
        %1121 = vmatpush1.msra.mxu0 0.0
        %1122 = vmatprep.subr.mxu0 0.0
        %1123 = vmatpush1.msra.mxu0 0.0
        %1124 = vmatprep.subr.mxu0 0.0
        %1125 = vmatpush1.msra.mxu0 0.0
        %1126 = vmatprep.subr.mxu0 0.0
        %1127 = vmatpush1.msra.mxu0 0.0
        %1128 = vmatprep.subr.mxu0 0.0
        %1129 = vmatpush1.msra.mxu0 0.0
        %1130 = vmatprep.subr.mxu0 0.0
        %1131 = vmatpush1.msra.mxu0 0.0
        %1132 = vmatprep.subr.mxu0 0.0
        %1133 = vmatpush1.msra.mxu0 0.0
        %1134 = vmatprep.subr.mxu0 0.0
        %1135 = vmatpush1.msra.mxu0 0.0
        %1136 = vmatprep.subr.mxu0 0.0
        %1137 = vmatpush1.msra.mxu0 0.0
        %1138 = vmatprep.subr.mxu0 0.0
        %1139 = vmatpush1.msra.mxu0 0.0
        %1140 = vmatprep.subr.mxu0 0.0
        %1141 = vmatpush1.msra.mxu0 0.0
        %1142 = vmatprep.subr.mxu0 0.0
        %1143 = vmatpush1.msra.mxu0 0.0
        %1144 = vmatprep.subr.mxu0 0.0
        %1145 = vmatpush1.msra.mxu0 0.0
        %1146 = vmatprep.subr.mxu0 0.0
        %1147 = vmatpush1.msra.mxu0 0.0
        %1148 = vmatprep.subr.mxu0 0.0
        %1149 = vmatpush1.msra.mxu0 0.0
        %1150 = vmatprep.subr.mxu0 0.0
        %1151 = vmatpush1.msra.mxu0 0.0
        %1152 = vmatprep.subr.mxu0 0.0
        %1153 = vmatpush1.msra.mxu0 0.0
        %1154 = vmatprep.subr.mxu0 0.0
        %1155 = vmatpush1.msra.mxu0 0.0
        %1156 = vmatprep.subr.mxu0 0.0
        %1157 = vmatpush1.msra.mxu0 0.0
        %1158 = vmatprep.subr.mxu0 0.0
        %1159 = vmatpush1.msra.mxu0 0.0
        %1160 = vmatprep.subr.mxu0 0.0
        %1161 = vmatpush1.msra.mxu0 0.0
        %1162 = vmatprep.subr.mxu0 0.0
        %1163 = vmatpush1.msra.mxu0 0.0
        %1164 = vmatprep.mubr.f32.mxu0 0.0
        %1165 = vmatmul.mubr.f32.gmra.mrb[0].mxu0 %v748
        %v1166 = vpop.f32.mrb[0].mxu0
        %v1167 = vadd.f32 0.0, %v1166
        %v1168 = vpop.f32.mrb[0].mxu0
        %1169 = vdwg.mxu0
        %1170 = vmatprep.subr.mxu0 0.0
        %1171 = vmatpush1.msra.mxu0 %v609
        %1172 = vmatprep.subr.mxu0 0.0
        %1173 = vmatpush1.msra.mxu0 %v614
        %1174 = vmatprep.subr.mxu0 0.0
        %1175 = vmatpush1.msra.mxu0 0.0
        %1176 = vmatprep.subr.mxu0 0.0
        %1177 = vmatpush1.msra.mxu0 0.0
        %1178 = vmatprep.subr.mxu0 0.0
        %1179 = vmatpush1.msra.mxu0 0.0
        %1180 = vmatprep.subr.mxu0 0.0
        %1181 = vmatpush1.msra.mxu0 0.0
        %1182 = vmatprep.subr.mxu0 0.0
        %1183 = vmatpush1.msra.mxu0 0.0
        %1184 = vmatprep.subr.mxu0 0.0
        %1185 = vmatpush1.msra.mxu0 0.0
        %1186 = vmatprep.subr.mxu0 0.0
        %1187 = vmatpush1.msra.mxu0 0.0
        %1188 = vmatprep.subr.mxu0 0.0
        %1189 = vmatpush1.msra.mxu0 0.0
        %1190 = vmatprep.subr.mxu0 0.0
        %1191 = vmatpush1.msra.mxu0 0.0
        %1192 = vmatprep.subr.mxu0 0.0
        %1193 = vmatpush1.msra.mxu0 0.0
        %1194 = vmatprep.subr.mxu0 0.0
        %1195 = vmatpush1.msra.mxu0 0.0
        %1196 = vmatprep.subr.mxu0 0.0
        %1197 = vmatpush1.msra.mxu0 0.0
        %1198 = vmatprep.subr.mxu0 0.0
        %1199 = vmatpush1.msra.mxu0 0.0
        %1200 = vmatprep.subr.mxu0 0.0
        %1201 = vmatpush1.msra.mxu0 0.0
        %1202 = vmatprep.subr.mxu0 0.0
        %1203 = vmatpush1.msra.mxu0 0.0
        %1204 = vmatprep.subr.mxu0 0.0
        %1205 = vmatpush1.msra.mxu0 0.0
        %1206 = vmatprep.subr.mxu0 0.0
        %1207 = vmatpush1.msra.mxu0 0.0
        %1208 = vmatprep.subr.mxu0 0.0
        %1209 = vmatpush1.msra.mxu0 0.0
        %1210 = vmatprep.subr.mxu0 0.0
        %1211 = vmatpush1.msra.mxu0 0.0
        %1212 = vmatprep.subr.mxu0 0.0
        %1213 = vmatpush1.msra.mxu0 0.0
        %1214 = vmatprep.subr.mxu0 0.0
        %1215 = vmatpush1.msra.mxu0 0.0
        %1216 = vmatprep.subr.mxu0 0.0
        %1217 = vmatpush1.msra.mxu0 0.0
        %1218 = vmatprep.subr.mxu0 0.0
        %1219 = vmatpush1.msra.mxu0 0.0
        %1220 = vmatprep.subr.mxu0 0.0
        %1221 = vmatpush1.msra.mxu0 0.0
        %1222 = vmatprep.subr.mxu0 0.0
        %1223 = vmatpush1.msra.mxu0 0.0
        %1224 = vmatprep.subr.mxu0 0.0
        %1225 = vmatpush1.msra.mxu0 0.0
        %1226 = vmatprep.subr.mxu0 0.0
        %1227 = vmatpush1.msra.mxu0 0.0
        %1228 = vmatprep.subr.mxu0 0.0
        %1229 = vmatpush1.msra.mxu0 0.0
        %1230 = vmatprep.subr.mxu0 0.0
        %1231 = vmatpush1.msra.mxu0 0.0
        %1232 = vmatprep.subr.mxu0 0.0
        %1233 = vmatpush1.msra.mxu0 0.0
        %1234 = vmatprep.mubr.f32.mxu0 0.0
        %1235 = vmatmul.mubr.f32.gmra.mrb[0].mxu0 %v748
        %v1236 = vpop.f32.mrb[0].mxu0
        %v1237 = vadd.f32 0.0, %v1236
        %v1238 = vpop.f32.mrb[0].mxu0
        %1239 = vdwg.mxu0
        %1240 = vmatprep.subr.mxu0 0.0
        %1241 = vmatpush1.msra.mxu0 %v619
        %1242 = vmatprep.subr.mxu0 0.0
        %1243 = vmatpush1.msra.mxu0 %v624
        %1244 = vmatprep.subr.mxu0 0.0
        %1245 = vmatpush1.msra.mxu0 0.0
        %1246 = vmatprep.subr.mxu0 0.0
        %1247 = vmatpush1.msra.mxu0 0.0
        %1248 = vmatprep.subr.mxu0 0.0
        %1249 = vmatpush1.msra.mxu0 0.0
        %1250 = vmatprep.subr.mxu0 0.0
        %1251 = vmatpush1.msra.mxu0 0.0
        %1252 = vmatprep.subr.mxu0 0.0
        %1253 = vmatpush1.msra.mxu0 0.0
        %1254 = vmatprep.subr.mxu0 0.0
        %1255 = vmatpush1.msra.mxu0 0.0
        %1256 = vmatprep.subr.mxu0 0.0
        %1257 = vmatpush1.msra.mxu0 0.0
        %1258 = vmatprep.subr.mxu0 0.0
        %1259 = vmatpush1.msra.mxu0 0.0
        %1260 = vmatprep.subr.mxu0 0.0
        %1261 = vmatpush1.msra.mxu0 0.0
        %1262 = vmatprep.subr.mxu0 0.0
        %1263 = vmatpush1.msra.mxu0 0.0
        %1264 = vmatprep.subr.mxu0 0.0
        %1265 = vmatpush1.msra.mxu0 0.0
        %1266 = vmatprep.subr.mxu0 0.0
        %1267 = vmatpush1.msra.mxu0 0.0
        %1268 = vmatprep.subr.mxu0 0.0
        %1269 = vmatpush1.msra.mxu0 0.0
        %1270 = vmatprep.subr.mxu0 0.0
        %1271 = vmatpush1.msra.mxu0 0.0
        %1272 = vmatprep.subr.mxu0 0.0
        %1273 = vmatpush1.msra.mxu0 0.0
        %1274 = vmatprep.subr.mxu0 0.0
        %1275 = vmatpush1.msra.mxu0 0.0
        %1276 = vmatprep.subr.mxu0 0.0
        %1277 = vmatpush1.msra.mxu0 0.0
        %1278 = vmatprep.subr.mxu0 0.0
        %1279 = vmatpush1.msra.mxu0 0.0
        %1280 = vmatprep.subr.mxu0 0.0
        %1281 = vmatpush1.msra.mxu0 0.0
        %1282 = vmatprep.subr.mxu0 0.0
        %1283 = vmatpush1.msra.mxu0 0.0
        %1284 = vmatprep.subr.mxu0 0.0
        %1285 = vmatpush1.msra.mxu0 0.0
        %1286 = vmatprep.subr.mxu0 0.0
        %1287 = vmatpush1.msra.mxu0 0.0
        %1288 = vmatprep.subr.mxu0 0.0
        %1289 = vmatpush1.msra.mxu0 0.0
        %1290 = vmatprep.subr.mxu0 0.0
        %1291 = vmatpush1.msra.mxu0 0.0
        %1292 = vmatprep.subr.mxu0 0.0
        %1293 = vmatpush1.msra.mxu0 0.0
        %1294 = vmatprep.subr.mxu0 0.0
        %1295 = vmatpush1.msra.mxu0 0.0
        %1296 = vmatprep.subr.mxu0 0.0
        %1297 = vmatpush1.msra.mxu0 0.0
        %1298 = vmatprep.subr.mxu0 0.0
        %1299 = vmatpush1.msra.mxu0 0.0
        %1300 = vmatprep.subr.mxu0 0.0
        %1301 = vmatpush1.msra.mxu0 0.0
        %1302 = vmatprep.subr.mxu0 0.0
        %1303 = vmatpush1.msra.mxu0 0.0
        %1304 = vmatprep.mubr.f32.mxu0 0.0
        %1305 = vmatmul.mubr.f32.gmra.mrb[0].mxu0 %v748
        %v1306 = vpop.f32.mrb[0].mxu0
        %v1307 = vadd.f32 0.0, %v1306
        %v1308 = vpop.f32.mrb[0].mxu0
        %1309 = vdwg.mxu0
        %1310 = vmatprep.subr.mxu0 0.0
        %1311 = vmatpush1.msra.mxu0 %v629
        %1312 = vmatprep.subr.mxu0 0.0
        %1313 = vmatpush1.msra.mxu0 %v634
        %1314 = vmatprep.subr.mxu0 0.0
        %1315 = vmatpush1.msra.mxu0 0.0
        %1316 = vmatprep.subr.mxu0 0.0
        %1317 = vmatpush1.msra.mxu0 0.0
        %1318 = vmatprep.subr.mxu0 0.0
        %1319 = vmatpush1.msra.mxu0 0.0
        %1320 = vmatprep.subr.mxu0 0.0
        %1321 = vmatpush1.msra.mxu0 0.0
        %1322 = vmatprep.subr.mxu0 0.0
        %1323 = vmatpush1.msra.mxu0 0.0
        %1324 = vmatprep.subr.mxu0 0.0
        %1325 = vmatpush1.msra.mxu0 0.0
        %1326 = vmatprep.subr.mxu0 0.0
        %1327 = vmatpush1.msra.mxu0 0.0
        %1328 = vmatprep.subr.mxu0 0.0
        %1329 = vmatpush1.msra.mxu0 0.0
        %1330 = vmatprep.subr.mxu0 0.0
        %1331 = vmatpush1.msra.mxu0 0.0
        %1332 = vmatprep.subr.mxu0 0.0
        %1333 = vmatpush1.msra.mxu0 0.0
        %1334 = vmatprep.subr.mxu0 0.0
        %1335 = vmatpush1.msra.mxu0 0.0
        %1336 = vmatprep.subr.mxu0 0.0
        %1337 = vmatpush1.msra.mxu0 0.0
        %1338 = vmatprep.subr.mxu0 0.0
        %1339 = vmatpush1.msra.mxu0 0.0
        %1340 = vmatprep.subr.mxu0 0.0
        %1341 = vmatpush1.msra.mxu0 0.0
        %1342 = vmatprep.subr.mxu0 0.0
        %1343 = vmatpush1.msra.mxu0 0.0
        %1344 = vmatprep.subr.mxu0 0.0
        %1345 = vmatpush1.msra.mxu0 0.0
        %1346 = vmatprep.subr.mxu0 0.0
        %1347 = vmatpush1.msra.mxu0 0.0
        %1348 = vmatprep.subr.mxu0 0.0
        %1349 = vmatpush1.msra.mxu0 0.0
        %1350 = vmatprep.subr.mxu0 0.0
        %1351 = vmatpush1.msra.mxu0 0.0
        %1352 = vmatprep.subr.mxu0 0.0
        %1353 = vmatpush1.msra.mxu0 0.0
        %1354 = vmatprep.subr.mxu0 0.0
        %1355 = vmatpush1.msra.mxu0 0.0
        %1356 = vmatprep.subr.mxu0 0.0
        %1357 = vmatpush1.msra.mxu0 0.0
        %1358 = vmatprep.subr.mxu0 0.0
        %1359 = vmatpush1.msra.mxu0 0.0
        %1360 = vmatprep.subr.mxu0 0.0
        %1361 = vmatpush1.msra.mxu0 0.0
        %1362 = vmatprep.subr.mxu0 0.0
        %1363 = vmatpush1.msra.mxu0 0.0
        %1364 = vmatprep.subr.mxu0 0.0
        %1365 = vmatpush1.msra.mxu0 0.0
        %1366 = vmatprep.subr.mxu0 0.0
        %1367 = vmatpush1.msra.mxu0 0.0
        %1368 = vmatprep.subr.mxu0 0.0
        %1369 = vmatpush1.msra.mxu0 0.0
        %1370 = vmatprep.subr.mxu0 0.0
        %1371 = vmatpush1.msra.mxu0 0.0
        %1372 = vmatprep.subr.mxu0 0.0
        %1373 = vmatpush1.msra.mxu0 0.0
        %1374 = vmatprep.mubr.f32.mxu0 0.0
        %1375 = vmatmul.mubr.f32.gmra.mrb[0].mxu0 %v748
        %v1376 = vpop.f32.mrb[0].mxu0
        %v1377 = vadd.f32 0.0, %v1376
        %v1378 = vpop.f32.mrb[0].mxu0
        %1379 = vdwg.mxu0
        %1380 = vmatprep.subr.mxu0 0.0
        %1381 = vmatpush1.msra.mxu0 %v639
        %1382 = vmatprep.subr.mxu0 0.0
        %1383 = vmatpush1.msra.mxu0 %v644
        %1384 = vmatprep.subr.mxu0 0.0
        %1385 = vmatpush1.msra.mxu0 0.0
        %1386 = vmatprep.subr.mxu0 0.0
        %1387 = vmatpush1.msra.mxu0 0.0
        %1388 = vmatprep.subr.mxu0 0.0
        %1389 = vmatpush1.msra.mxu0 0.0
        %1390 = vmatprep.subr.mxu0 0.0
        %1391 = vmatpush1.msra.mxu0 0.0
        %1392 = vmatprep.subr.mxu0 0.0
        %1393 = vmatpush1.msra.mxu0 0.0
        %1394 = vmatprep.subr.mxu0 0.0
        %1395 = vmatpush1.msra.mxu0 0.0
        %1396 = vmatprep.subr.mxu0 0.0
        %1397 = vmatpush1.msra.mxu0 0.0
        %1398 = vmatprep.subr.mxu0 0.0
        %1399 = vmatpush1.msra.mxu0 0.0
        %1400 = vmatprep.subr.mxu0 0.0
        %1401 = vmatpush1.msra.mxu0 0.0
        %1402 = vmatprep.subr.mxu0 0.0
        %1403 = vmatpush1.msra.mxu0 0.0
        %1404 = vmatprep.subr.mxu0 0.0
        %1405 = vmatpush1.msra.mxu0 0.0
        %1406 = vmatprep.subr.mxu0 0.0
        %1407 = vmatpush1.msra.mxu0 0.0
        %1408 = vmatprep.subr.mxu0 0.0
        %1409 = vmatpush1.msra.mxu0 0.0
        %1410 = vmatprep.subr.mxu0 0.0
        %1411 = vmatpush1.msra.mxu0 0.0
        %1412 = vmatprep.subr.mxu0 0.0
        %1413 = vmatpush1.msra.mxu0 0.0
        %1414 = vmatprep.subr.mxu0 0.0
        %1415 = vmatpush1.msra.mxu0 0.0
        %1416 = vmatprep.subr.mxu0 0.0
        %1417 = vmatpush1.msra.mxu0 0.0
        %1418 = vmatprep.subr.mxu0 0.0
        %1419 = vmatpush1.msra.mxu0 0.0
        %1420 = vmatprep.subr.mxu0 0.0
        %1421 = vmatpush1.msra.mxu0 0.0
        %1422 = vmatprep.subr.mxu0 0.0
        %1423 = vmatpush1.msra.mxu0 0.0
        %1424 = vmatprep.subr.mxu0 0.0
        %1425 = vmatpush1.msra.mxu0 0.0
        %1426 = vmatprep.subr.mxu0 0.0
        %1427 = vmatpush1.msra.mxu0 0.0
        %1428 = vmatprep.subr.mxu0 0.0
        %1429 = vmatpush1.msra.mxu0 0.0
        %1430 = vmatprep.subr.mxu0 0.0
        %1431 = vmatpush1.msra.mxu0 0.0
        %1432 = vmatprep.subr.mxu0 0.0
        %1433 = vmatpush1.msra.mxu0 0.0
        %1434 = vmatprep.subr.mxu0 0.0
        %1435 = vmatpush1.msra.mxu0 0.0
        %1436 = vmatprep.subr.mxu0 0.0
        %1437 = vmatpush1.msra.mxu0 0.0
        %1438 = vmatprep.subr.mxu0 0.0
        %1439 = vmatpush1.msra.mxu0 0.0
        %1440 = vmatprep.subr.mxu0 0.0
        %1441 = vmatpush1.msra.mxu0 0.0
        %1442 = vmatprep.subr.mxu0 0.0
        %1443 = vmatpush1.msra.mxu0 0.0
        %1444 = vmatprep.mubr.f32.mxu0 0.0
        %1445 = vmatmul.mubr.f32.gmra.mrb[0].mxu0 %v748
        %v1446 = vpop.f32.mrb[0].mxu0
        %v1447 = vadd.f32 0.0, %v1446
        %v1448 = vpop.f32.mrb[0].mxu0
        %1449 = vdwg.mxu0
        %1450 = vmatprep.subr.mxu0 0.0
        %1451 = vmatpush1.msra.mxu0 %v649
        %1452 = vmatprep.subr.mxu0 0.0
        %1453 = vmatpush1.msra.mxu0 %v654
        %1454 = vmatprep.subr.mxu0 0.0
        %1455 = vmatpush1.msra.mxu0 0.0
        %1456 = vmatprep.subr.mxu0 0.0
        %1457 = vmatpush1.msra.mxu0 0.0
        %1458 = vmatprep.subr.mxu0 0.0
        %1459 = vmatpush1.msra.mxu0 0.0
        %1460 = vmatprep.subr.mxu0 0.0
        %1461 = vmatpush1.msra.mxu0 0.0
        %1462 = vmatprep.subr.mxu0 0.0
        %1463 = vmatpush1.msra.mxu0 0.0
        %1464 = vmatprep.subr.mxu0 0.0
        %1465 = vmatpush1.msra.mxu0 0.0
        %1466 = vmatprep.subr.mxu0 0.0
        %1467 = vmatpush1.msra.mxu0 0.0
        %1468 = vmatprep.subr.mxu0 0.0
        %1469 = vmatpush1.msra.mxu0 0.0
        %1470 = vmatprep.subr.mxu0 0.0
        %1471 = vmatpush1.msra.mxu0 0.0
        %1472 = vmatprep.subr.mxu0 0.0
        %1473 = vmatpush1.msra.mxu0 0.0
        %1474 = vmatprep.subr.mxu0 0.0
        %1475 = vmatpush1.msra.mxu0 0.0
        %1476 = vmatprep.subr.mxu0 0.0
        %1477 = vmatpush1.msra.mxu0 0.0
        %1478 = vmatprep.subr.mxu0 0.0
        %1479 = vmatpush1.msra.mxu0 0.0
        %1480 = vmatprep.subr.mxu0 0.0
        %1481 = vmatpush1.msra.mxu0 0.0
        %1482 = vmatprep.subr.mxu0 0.0
        %1483 = vmatpush1.msra.mxu0 0.0
        %1484 = vmatprep.subr.mxu0 0.0
        %1485 = vmatpush1.msra.mxu0 0.0
        %1486 = vmatprep.subr.mxu0 0.0
        %1487 = vmatpush1.msra.mxu0 0.0
        %1488 = vmatprep.subr.mxu0 0.0
        %1489 = vmatpush1.msra.mxu0 0.0
        %1490 = vmatprep.subr.mxu0 0.0
        %1491 = vmatpush1.msra.mxu0 0.0
        %1492 = vmatprep.subr.mxu0 0.0
        %1493 = vmatpush1.msra.mxu0 0.0
        %1494 = vmatprep.subr.mxu0 0.0
        %1495 = vmatpush1.msra.mxu0 0.0
        %1496 = vmatprep.subr.mxu0 0.0
        %1497 = vmatpush1.msra.mxu0 0.0
        %1498 = vmatprep.subr.mxu0 0.0
        %1499 = vmatpush1.msra.mxu0 0.0
        %1500 = vmatprep.subr.mxu0 0.0
        %1501 = vmatpush1.msra.mxu0 0.0
        %1502 = vmatprep.subr.mxu0 0.0
        %1503 = vmatpush1.msra.mxu0 0.0
        %1504 = vmatprep.subr.mxu0 0.0
        %1505 = vmatpush1.msra.mxu0 0.0
        %1506 = vmatprep.subr.mxu0 0.0
        %1507 = vmatpush1.msra.mxu0 0.0
        %1508 = vmatprep.subr.mxu0 0.0
        %1509 = vmatpush1.msra.mxu0 0.0
        %1510 = vmatprep.subr.mxu0 0.0
        %1511 = vmatpush1.msra.mxu0 0.0
        %1512 = vmatprep.subr.mxu0 0.0
        %1513 = vmatpush1.msra.mxu0 0.0
        %1514 = vmatprep.mubr.f32.mxu0 0.0
        %1515 = vmatmul.mubr.f32.gmra.mrb[0].mxu0 %v748
        %v1516 = vpop.f32.mrb[0].mxu0
        %v1517 = vadd.f32 0.0, %v1516
        %v1518 = vpop.f32.mrb[0].mxu0
        %1519 = vdwg.mxu0
        %1520 = vmatprep.subr.mxu0 0.0
        %1521 = vmatpush1.msra.mxu0 %v659
        %1522 = vmatprep.subr.mxu0 0.0
        %1523 = vmatpush1.msra.mxu0 %v664
        %1524 = vmatprep.subr.mxu0 0.0
        %1525 = vmatpush1.msra.mxu0 0.0
        %1526 = vmatprep.subr.mxu0 0.0
        %1527 = vmatpush1.msra.mxu0 0.0
        %1528 = vmatprep.subr.mxu0 0.0
        %1529 = vmatpush1.msra.mxu0 0.0
        %1530 = vmatprep.subr.mxu0 0.0
        %1531 = vmatpush1.msra.mxu0 0.0
        %1532 = vmatprep.subr.mxu0 0.0
        %1533 = vmatpush1.msra.mxu0 0.0
        %1534 = vmatprep.subr.mxu0 0.0
        %1535 = vmatpush1.msra.mxu0 0.0
        %1536 = vmatprep.subr.mxu0 0.0
        %1537 = vmatpush1.msra.mxu0 0.0
        %1538 = vmatprep.subr.mxu0 0.0
        %1539 = vmatpush1.msra.mxu0 0.0
        %1540 = vmatprep.subr.mxu0 0.0
        %1541 = vmatpush1.msra.mxu0 0.0
        %1542 = vmatprep.subr.mxu0 0.0
        %1543 = vmatpush1.msra.mxu0 0.0
        %1544 = vmatprep.subr.mxu0 0.0
        %1545 = vmatpush1.msra.mxu0 0.0
        %1546 = vmatprep.subr.mxu0 0.0
        %1547 = vmatpush1.msra.mxu0 0.0
        %1548 = vmatprep.subr.mxu0 0.0
        %1549 = vmatpush1.msra.mxu0 0.0
        %1550 = vmatprep.subr.mxu0 0.0
        %1551 = vmatpush1.msra.mxu0 0.0
        %1552 = vmatprep.subr.mxu0 0.0
        %1553 = vmatpush1.msra.mxu0 0.0
        %1554 = vmatprep.subr.mxu0 0.0
        %1555 = vmatpush1.msra.mxu0 0.0
        %1556 = vmatprep.subr.mxu0 0.0
        %1557 = vmatpush1.msra.mxu0 0.0
        %1558 = vmatprep.subr.mxu0 0.0
        %1559 = vmatpush1.msra.mxu0 0.0
        %1560 = vmatprep.subr.mxu0 0.0
        %1561 = vmatpush1.msra.mxu0 0.0
        %1562 = vmatprep.subr.mxu0 0.0
        %1563 = vmatpush1.msra.mxu0 0.0
        %1564 = vmatprep.subr.mxu0 0.0
        %1565 = vmatpush1.msra.mxu0 0.0
        %1566 = vmatprep.subr.mxu0 0.0
        %1567 = vmatpush1.msra.mxu0 0.0
        %1568 = vmatprep.subr.mxu0 0.0
        %1569 = vmatpush1.msra.mxu0 0.0
        %1570 = vmatprep.subr.mxu0 0.0
        %1571 = vmatpush1.msra.mxu0 0.0
        %1572 = vmatprep.subr.mxu0 0.0
        %1573 = vmatpush1.msra.mxu0 0.0
        %1574 = vmatprep.subr.mxu0 0.0
        %1575 = vmatpush1.msra.mxu0 0.0
        %1576 = vmatprep.subr.mxu0 0.0
        %1577 = vmatpush1.msra.mxu0 0.0
        %1578 = vmatprep.subr.mxu0 0.0
        %1579 = vmatpush1.msra.mxu0 0.0
        %1580 = vmatprep.subr.mxu0 0.0
        %1581 = vmatpush1.msra.mxu0 0.0
        %1582 = vmatprep.subr.mxu0 0.0
        %1583 = vmatpush1.msra.mxu0 0.0
        %1584 = vmatprep.mubr.f32.mxu0 0.0
        %1585 = vmatmul.mubr.f32.gmra.mrb[0].mxu0 %v748
        %v1586 = vpop.f32.mrb[0].mxu0
        %v1587 = vadd.f32 0.0, %v1586
        %v1588 = vpop.f32.mrb[0].mxu0
        %1589 = vdwg.mxu0
        %1590 = vmatprep.subr.mxu0 0.0
        %1591 = vmatpush1.msra.mxu0 %v669
        %1592 = vmatprep.subr.mxu0 0.0
        %1593 = vmatpush1.msra.mxu0 %v674
        %1594 = vmatprep.subr.mxu0 0.0
        %1595 = vmatpush1.msra.mxu0 0.0
        %1596 = vmatprep.subr.mxu0 0.0
        %1597 = vmatpush1.msra.mxu0 0.0
        %1598 = vmatprep.subr.mxu0 0.0
        %1599 = vmatpush1.msra.mxu0 0.0
        %1600 = vmatprep.subr.mxu0 0.0
        %1601 = vmatpush1.msra.mxu0 0.0
        %1602 = vmatprep.subr.mxu0 0.0
        %1603 = vmatpush1.msra.mxu0 0.0
        %1604 = vmatprep.subr.mxu0 0.0
        %1605 = vmatpush1.msra.mxu0 0.0
        %1606 = vmatprep.subr.mxu0 0.0
        %1607 = vmatpush1.msra.mxu0 0.0
        %1608 = vmatprep.subr.mxu0 0.0
        %1609 = vmatpush1.msra.mxu0 0.0
        %1610 = vmatprep.subr.mxu0 0.0
        %1611 = vmatpush1.msra.mxu0 0.0
        %1612 = vmatprep.subr.mxu0 0.0
        %1613 = vmatpush1.msra.mxu0 0.0
        %1614 = vmatprep.subr.mxu0 0.0
        %1615 = vmatpush1.msra.mxu0 0.0
        %1616 = vmatprep.subr.mxu0 0.0
        %1617 = vmatpush1.msra.mxu0 0.0
        %1618 = vmatprep.subr.mxu0 0.0
        %1619 = vmatpush1.msra.mxu0 0.0
        %1620 = vmatprep.subr.mxu0 0.0
        %1621 = vmatpush1.msra.mxu0 0.0
        %1622 = vmatprep.subr.mxu0 0.0
        %1623 = vmatpush1.msra.mxu0 0.0
        %1624 = vmatprep.subr.mxu0 0.0
        %1625 = vmatpush1.msra.mxu0 0.0
        %1626 = vmatprep.subr.mxu0 0.0
        %1627 = vmatpush1.msra.mxu0 0.0
        %1628 = vmatprep.subr.mxu0 0.0
        %1629 = vmatpush1.msra.mxu0 0.0
        %1630 = vmatprep.subr.mxu0 0.0
        %1631 = vmatpush1.msra.mxu0 0.0
        %1632 = vmatprep.subr.mxu0 0.0
        %1633 = vmatpush1.msra.mxu0 0.0
        %1634 = vmatprep.subr.mxu0 0.0
        %1635 = vmatpush1.msra.mxu0 0.0
        %1636 = vmatprep.subr.mxu0 0.0
        %1637 = vmatpush1.msra.mxu0 0.0
        %1638 = vmatprep.subr.mxu0 0.0
        %1639 = vmatpush1.msra.mxu0 0.0
        %1640 = vmatprep.subr.mxu0 0.0
        %1641 = vmatpush1.msra.mxu0 0.0
        %1642 = vmatprep.subr.mxu0 0.0
        %1643 = vmatpush1.msra.mxu0 0.0
        %1644 = vmatprep.subr.mxu0 0.0
        %1645 = vmatpush1.msra.mxu0 0.0
        %1646 = vmatprep.subr.mxu0 0.0
        %1647 = vmatpush1.msra.mxu0 0.0
        %1648 = vmatprep.subr.mxu0 0.0
        %1649 = vmatpush1.msra.mxu0 0.0
        %1650 = vmatprep.subr.mxu0 0.0
        %1651 = vmatpush1.msra.mxu0 0.0
        %1652 = vmatprep.subr.mxu0 0.0
        %1653 = vmatpush1.msra.mxu0 0.0
        %1654 = vmatprep.mubr.f32.mxu0 0.0
        %1655 = vmatmul.mubr.f32.gmra.mrb[0].mxu0 %v748
        %v1656 = vpop.f32.mrb[0].mxu0
        %v1657 = vadd.f32 0.0, %v1656
        %v1658 = vpop.f32.mrb[0].mxu0
        %1659 = vdwg.mxu0
        %1660 = vmatprep.subr.mxu0 0.0
        %1661 = vmatpush1.msra.mxu0 %v679
        %1662 = vmatprep.subr.mxu0 0.0
        %1663 = vmatpush1.msra.mxu0 %v684
        %1664 = vmatprep.subr.mxu0 0.0
        %1665 = vmatpush1.msra.mxu0 0.0
        %1666 = vmatprep.subr.mxu0 0.0
        %1667 = vmatpush1.msra.mxu0 0.0
        %1668 = vmatprep.subr.mxu0 0.0
        %1669 = vmatpush1.msra.mxu0 0.0
        %1670 = vmatprep.subr.mxu0 0.0
        %1671 = vmatpush1.msra.mxu0 0.0
        %1672 = vmatprep.subr.mxu0 0.0
        %1673 = vmatpush1.msra.mxu0 0.0
        %1674 = vmatprep.subr.mxu0 0.0
        %1675 = vmatpush1.msra.mxu0 0.0
        %1676 = vmatprep.subr.mxu0 0.0
        %1677 = vmatpush1.msra.mxu0 0.0
        %1678 = vmatprep.subr.mxu0 0.0
        %1679 = vmatpush1.msra.mxu0 0.0
        %1680 = vmatprep.subr.mxu0 0.0
        %1681 = vmatpush1.msra.mxu0 0.0
        %1682 = vmatprep.subr.mxu0 0.0
        %1683 = vmatpush1.msra.mxu0 0.0
        %1684 = vmatprep.subr.mxu0 0.0
        %1685 = vmatpush1.msra.mxu0 0.0
        %1686 = vmatprep.subr.mxu0 0.0
        %1687 = vmatpush1.msra.mxu0 0.0
        %1688 = vmatprep.subr.mxu0 0.0
        %1689 = vmatpush1.msra.mxu0 0.0
        %1690 = vmatprep.subr.mxu0 0.0
        %1691 = vmatpush1.msra.mxu0 0.0
        %1692 = vmatprep.subr.mxu0 0.0
        %1693 = vmatpush1.msra.mxu0 0.0
        %1694 = vmatprep.subr.mxu0 0.0
        %1695 = vmatpush1.msra.mxu0 0.0
        %1696 = vmatprep.subr.mxu0 0.0
        %1697 = vmatpush1.msra.mxu0 0.0
        %1698 = vmatprep.subr.mxu0 0.0
        %1699 = vmatpush1.msra.mxu0 0.0
        %1700 = vmatprep.subr.mxu0 0.0
        %1701 = vmatpush1.msra.mxu0 0.0
        %1702 = vmatprep.subr.mxu0 0.0
        %1703 = vmatpush1.msra.mxu0 0.0
        %1704 = vmatprep.subr.mxu0 0.0
        %1705 = vmatpush1.msra.mxu0 0.0
        %1706 = vmatprep.subr.mxu0 0.0
        %1707 = vmatpush1.msra.mxu0 0.0
        %1708 = vmatprep.subr.mxu0 0.0
        %1709 = vmatpush1.msra.mxu0 0.0
        %1710 = vmatprep.subr.mxu0 0.0
        %1711 = vmatpush1.msra.mxu0 0.0
        %1712 = vmatprep.subr.mxu0 0.0
        %1713 = vmatpush1.msra.mxu0 0.0
        %1714 = vmatprep.subr.mxu0 0.0
        %1715 = vmatpush1.msra.mxu0 0.0
        %1716 = vmatprep.subr.mxu0 0.0
        %1717 = vmatpush1.msra.mxu0 0.0
        %1718 = vmatprep.subr.mxu0 0.0
        %1719 = vmatpush1.msra.mxu0 0.0
        %1720 = vmatprep.subr.mxu0 0.0
        %1721 = vmatpush1.msra.mxu0 0.0
        %1722 = vmatprep.subr.mxu0 0.0
        %1723 = vmatpush1.msra.mxu0 0.0
        %1724 = vmatprep.mubr.f32.mxu0 0.0
        %1725 = vmatmul.mubr.f32.gmra.mrb[0].mxu0 %v748
        %v1726 = vpop.f32.mrb[0].mxu0
        %v1727 = vadd.f32 0.0, %v1726
        %v1728 = vpop.f32.mrb[0].mxu0
        %1729 = vdwg.mxu0
        %1730 = vmatprep.subr.mxu0 0.0
        %1731 = vmatpush1.msra.mxu0 %v689
        %1732 = vmatprep.subr.mxu0 0.0
        %1733 = vmatpush1.msra.mxu0 %v694
        %1734 = vmatprep.subr.mxu0 0.0
        %1735 = vmatpush1.msra.mxu0 0.0
        %1736 = vmatprep.subr.mxu0 0.0
        %1737 = vmatpush1.msra.mxu0 0.0
        %1738 = vmatprep.subr.mxu0 0.0
        %1739 = vmatpush1.msra.mxu0 0.0
        %1740 = vmatprep.subr.mxu0 0.0
        %1741 = vmatpush1.msra.mxu0 0.0
        %1742 = vmatprep.subr.mxu0 0.0
        %1743 = vmatpush1.msra.mxu0 0.0
        %1744 = vmatprep.subr.mxu0 0.0
        %1745 = vmatpush1.msra.mxu0 0.0
        %1746 = vmatprep.subr.mxu0 0.0
        %1747 = vmatpush1.msra.mxu0 0.0
        %1748 = vmatprep.subr.mxu0 0.0
        %1749 = vmatpush1.msra.mxu0 0.0
        %1750 = vmatprep.subr.mxu0 0.0
        %1751 = vmatpush1.msra.mxu0 0.0
        %1752 = vmatprep.subr.mxu0 0.0
        %1753 = vmatpush1.msra.mxu0 0.0
        %1754 = vmatprep.subr.mxu0 0.0
        %1755 = vmatpush1.msra.mxu0 0.0
        %1756 = vmatprep.subr.mxu0 0.0
        %1757 = vmatpush1.msra.mxu0 0.0
        %1758 = vmatprep.subr.mxu0 0.0
        %1759 = vmatpush1.msra.mxu0 0.0
        %1760 = vmatprep.subr.mxu0 0.0
        %1761 = vmatpush1.msra.mxu0 0.0
        %1762 = vmatprep.subr.mxu0 0.0
        %1763 = vmatpush1.msra.mxu0 0.0
        %1764 = vmatprep.subr.mxu0 0.0
        %1765 = vmatpush1.msra.mxu0 0.0
        %1766 = vmatprep.subr.mxu0 0.0
        %1767 = vmatpush1.msra.mxu0 0.0
        %1768 = vmatprep.subr.mxu0 0.0
        %1769 = vmatpush1.msra.mxu0 0.0
        %1770 = vmatprep.subr.mxu0 0.0
        %1771 = vmatpush1.msra.mxu0 0.0
        %1772 = vmatprep.subr.mxu0 0.0
        %1773 = vmatpush1.msra.mxu0 0.0
        %1774 = vmatprep.subr.mxu0 0.0
        %1775 = vmatpush1.msra.mxu0 0.0
        %1776 = vmatprep.subr.mxu0 0.0
        %1777 = vmatpush1.msra.mxu0 0.0
        %1778 = vmatprep.subr.mxu0 0.0
        %1779 = vmatpush1.msra.mxu0 0.0
        %1780 = vmatprep.subr.mxu0 0.0
        %1781 = vmatpush1.msra.mxu0 0.0
        %1782 = vmatprep.subr.mxu0 0.0
        %1783 = vmatpush1.msra.mxu0 0.0
        %1784 = vmatprep.subr.mxu0 0.0
        %1785 = vmatpush1.msra.mxu0 0.0
        %1786 = vmatprep.subr.mxu0 0.0
        %1787 = vmatpush1.msra.mxu0 0.0
        %1788 = vmatprep.subr.mxu0 0.0
        %1789 = vmatpush1.msra.mxu0 0.0
        %1790 = vmatprep.subr.mxu0 0.0
        %1791 = vmatpush1.msra.mxu0 0.0
        %1792 = vmatprep.subr.mxu0 0.0
        %1793 = vmatpush1.msra.mxu0 0.0
        %1794 = vmatprep.mubr.f32.mxu0 0.0
        %1795 = vmatmul.mubr.f32.gmra.mrb[0].mxu0 %v748
        %v1796 = vpop.f32.mrb[0].mxu0
        %v1797 = vadd.f32 0.0, %v1796
        %v1798 = vpop.f32.mrb[0].mxu0
        %1799 = vdwg.mxu0
        %1800 = vmatprep.subr.mxu0 0.0
        %1801 = vmatpush1.msra.mxu0 %v699
        %1802 = vmatprep.subr.mxu0 0.0
        %1803 = vmatpush1.msra.mxu0 %v704
        %1804 = vmatprep.subr.mxu0 0.0
        %1805 = vmatpush1.msra.mxu0 0.0
        %1806 = vmatprep.subr.mxu0 0.0
        %1807 = vmatpush1.msra.mxu0 0.0
        %1808 = vmatprep.subr.mxu0 0.0
        %1809 = vmatpush1.msra.mxu0 0.0
        %1810 = vmatprep.subr.mxu0 0.0
        %1811 = vmatpush1.msra.mxu0 0.0
        %1812 = vmatprep.subr.mxu0 0.0
        %1813 = vmatpush1.msra.mxu0 0.0
        %1814 = vmatprep.subr.mxu0 0.0
        %1815 = vmatpush1.msra.mxu0 0.0
        %1816 = vmatprep.subr.mxu0 0.0
        %1817 = vmatpush1.msra.mxu0 0.0
        %1818 = vmatprep.subr.mxu0 0.0
        %1819 = vmatpush1.msra.mxu0 0.0
        %1820 = vmatprep.subr.mxu0 0.0
        %1821 = vmatpush1.msra.mxu0 0.0
        %1822 = vmatprep.subr.mxu0 0.0
        %1823 = vmatpush1.msra.mxu0 0.0
        %1824 = vmatprep.subr.mxu0 0.0
        %1825 = vmatpush1.msra.mxu0 0.0
        %1826 = vmatprep.subr.mxu0 0.0
        %1827 = vmatpush1.msra.mxu0 0.0
        %1828 = vmatprep.subr.mxu0 0.0
        %1829 = vmatpush1.msra.mxu0 0.0
        %1830 = vmatprep.subr.mxu0 0.0
        %1831 = vmatpush1.msra.mxu0 0.0
        %1832 = vmatprep.subr.mxu0 0.0
        %1833 = vmatpush1.msra.mxu0 0.0
        %1834 = vmatprep.subr.mxu0 0.0
        %1835 = vmatpush1.msra.mxu0 0.0
        %1836 = vmatprep.subr.mxu0 0.0
        %1837 = vmatpush1.msra.mxu0 0.0
        %1838 = vmatprep.subr.mxu0 0.0
        %1839 = vmatpush1.msra.mxu0 0.0
        %1840 = vmatprep.subr.mxu0 0.0
        %1841 = vmatpush1.msra.mxu0 0.0
        %1842 = vmatprep.subr.mxu0 0.0
        %1843 = vmatpush1.msra.mxu0 0.0
        %1844 = vmatprep.subr.mxu0 0.0
        %1845 = vmatpush1.msra.mxu0 0.0
        %1846 = vmatprep.subr.mxu0 0.0
        %1847 = vmatpush1.msra.mxu0 0.0
        %1848 = vmatprep.subr.mxu0 0.0
        %1849 = vmatpush1.msra.mxu0 0.0
        %1850 = vmatprep.subr.mxu0 0.0
        %1851 = vmatpush1.msra.mxu0 0.0
        %1852 = vmatprep.subr.mxu0 0.0
        %1853 = vmatpush1.msra.mxu0 0.0
        %1854 = vmatprep.subr.mxu0 0.0
        %1855 = vmatpush1.msra.mxu0 0.0
        %1856 = vmatprep.subr.mxu0 0.0
        %1857 = vmatpush1.msra.mxu0 0.0
        %1858 = vmatprep.subr.mxu0 0.0
        %1859 = vmatpush1.msra.mxu0 0.0
        %1860 = vmatprep.subr.mxu0 0.0
        %1861 = vmatpush1.msra.mxu0 0.0
        %1862 = vmatprep.subr.mxu0 0.0
        %1863 = vmatpush1.msra.mxu0 0.0
        %1864 = vmatprep.mubr.f32.mxu0 0.0
        %1865 = vmatmul.mubr.f32.gmra.mrb[0].mxu0 %v748
        %v1866 = vpop.f32.mrb[0].mxu0
        %v1867 = vadd.f32 0.0, %v1866
        %v1868 = vpop.f32.mrb[0].mxu0
        %1869 = vdwg.mxu0
        %1870 = vmatprep.subr.mxu0 0.0
        %1871 = vmatpush1.msra.mxu0 %v709
        %1872 = vmatprep.subr.mxu0 0.0
        %1873 = vmatpush1.msra.mxu0 %v714
        %1874 = vmatprep.subr.mxu0 0.0
        %1875 = vmatpush1.msra.mxu0 0.0
        %1876 = vmatprep.subr.mxu0 0.0
        %1877 = vmatpush1.msra.mxu0 0.0
        %1878 = vmatprep.subr.mxu0 0.0
        %1879 = vmatpush1.msra.mxu0 0.0
        %1880 = vmatprep.subr.mxu0 0.0
        %1881 = vmatpush1.msra.mxu0 0.0
        %1882 = vmatprep.subr.mxu0 0.0
        %1883 = vmatpush1.msra.mxu0 0.0
        %1884 = vmatprep.subr.mxu0 0.0
        %1885 = vmatpush1.msra.mxu0 0.0
        %1886 = vmatprep.subr.mxu0 0.0
        %1887 = vmatpush1.msra.mxu0 0.0
        %1888 = vmatprep.subr.mxu0 0.0
        %1889 = vmatpush1.msra.mxu0 0.0
        %1890 = vmatprep.subr.mxu0 0.0
        %1891 = vmatpush1.msra.mxu0 0.0
        %1892 = vmatprep.subr.mxu0 0.0
        %1893 = vmatpush1.msra.mxu0 0.0
        %1894 = vmatprep.subr.mxu0 0.0
        %1895 = vmatpush1.msra.mxu0 0.0
        %1896 = vmatprep.subr.mxu0 0.0
        %1897 = vmatpush1.msra.mxu0 0.0
        %1898 = vmatprep.subr.mxu0 0.0
        %1899 = vmatpush1.msra.mxu0 0.0
        %1900 = vmatprep.subr.mxu0 0.0
        %1901 = vmatpush1.msra.mxu0 0.0
        %1902 = vmatprep.subr.mxu0 0.0
        %1903 = vmatpush1.msra.mxu0 0.0
        %1904 = vmatprep.subr.mxu0 0.0
        %1905 = vmatpush1.msra.mxu0 0.0
        %1906 = vmatprep.subr.mxu0 0.0
        %1907 = vmatpush1.msra.mxu0 0.0
        %1908 = vmatprep.subr.mxu0 0.0
        %1909 = vmatpush1.msra.mxu0 0.0
        %1910 = vmatprep.subr.mxu0 0.0
        %1911 = vmatpush1.msra.mxu0 0.0
        %1912 = vmatprep.subr.mxu0 0.0
        %1913 = vmatpush1.msra.mxu0 0.0
        %1914 = vmatprep.subr.mxu0 0.0
        %1915 = vmatpush1.msra.mxu0 0.0
        %1916 = vmatprep.subr.mxu0 0.0
        %1917 = vmatpush1.msra.mxu0 0.0
        %1918 = vmatprep.subr.mxu0 0.0
        %1919 = vmatpush1.msra.mxu0 0.0
        %1920 = vmatprep.subr.mxu0 0.0
        %1921 = vmatpush1.msra.mxu0 0.0
        %1922 = vmatprep.subr.mxu0 0.0
        %1923 = vmatpush1.msra.mxu0 0.0
        %1924 = vmatprep.subr.mxu0 0.0
        %1925 = vmatpush1.msra.mxu0 0.0
        %1926 = vmatprep.subr.mxu0 0.0
        %1927 = vmatpush1.msra.mxu0 0.0
        %1928 = vmatprep.subr.mxu0 0.0
        %1929 = vmatpush1.msra.mxu0 0.0
        %1930 = vmatprep.subr.mxu0 0.0
        %1931 = vmatpush1.msra.mxu0 0.0
        %1932 = vmatprep.subr.mxu0 0.0
        %1933 = vmatpush1.msra.mxu0 0.0
        %1934 = vmatprep.mubr.f32.mxu0 0.0
        %1935 = vmatmul.mubr.f32.gmra.mrb[0].mxu0 %v748
        %v1936 = vpop.f32.mrb[0].mxu0
        %v1937 = vadd.f32 0.0, %v1936
        %v1938 = vpop.f32.mrb[0].mxu0
        %1939 = vdwg.mxu0
        %1940 = vmatprep.subr.mxu0 0.0
        %1941 = vmatpush1.msra.mxu0 %v719
        %1942 = vmatprep.subr.mxu0 0.0
        %1943 = vmatpush1.msra.mxu0 %v724
        %1944 = vmatprep.subr.mxu0 0.0
        %1945 = vmatpush1.msra.mxu0 0.0
        %1946 = vmatprep.subr.mxu0 0.0
        %1947 = vmatpush1.msra.mxu0 0.0
        %1948 = vmatprep.subr.mxu0 0.0
        %1949 = vmatpush1.msra.mxu0 0.0
        %1950 = vmatprep.subr.mxu0 0.0
        %1951 = vmatpush1.msra.mxu0 0.0
        %1952 = vmatprep.subr.mxu0 0.0
        %1953 = vmatpush1.msra.mxu0 0.0
        %1954 = vmatprep.subr.mxu0 0.0
        %1955 = vmatpush1.msra.mxu0 0.0
        %1956 = vmatprep.subr.mxu0 0.0
        %1957 = vmatpush1.msra.mxu0 0.0
        %1958 = vmatprep.subr.mxu0 0.0
        %1959 = vmatpush1.msra.mxu0 0.0
        %1960 = vmatprep.subr.mxu0 0.0
        %1961 = vmatpush1.msra.mxu0 0.0
        %1962 = vmatprep.subr.mxu0 0.0
        %1963 = vmatpush1.msra.mxu0 0.0
        %1964 = vmatprep.subr.mxu0 0.0
        %1965 = vmatpush1.msra.mxu0 0.0
        %1966 = vmatprep.subr.mxu0 0.0
        %1967 = vmatpush1.msra.mxu0 0.0
        %1968 = vmatprep.subr.mxu0 0.0
        %1969 = vmatpush1.msra.mxu0 0.0
        %1970 = vmatprep.subr.mxu0 0.0
        %1971 = vmatpush1.msra.mxu0 0.0
        %1972 = vmatprep.subr.mxu0 0.0
        %1973 = vmatpush1.msra.mxu0 0.0
        %1974 = vmatprep.subr.mxu0 0.0
        %1975 = vmatpush1.msra.mxu0 0.0
        %1976 = vmatprep.subr.mxu0 0.0
        %1977 = vmatpush1.msra.mxu0 0.0
        %1978 = vmatprep.subr.mxu0 0.0
        %1979 = vmatpush1.msra.mxu0 0.0
        %1980 = vmatprep.subr.mxu0 0.0
        %1981 = vmatpush1.msra.mxu0 0.0
        %1982 = vmatprep.subr.mxu0 0.0
        %1983 = vmatpush1.msra.mxu0 0.0
        %1984 = vmatprep.subr.mxu0 0.0
        %1985 = vmatpush1.msra.mxu0 0.0
        %1986 = vmatprep.subr.mxu0 0.0
        %1987 = vmatpush1.msra.mxu0 0.0
        %1988 = vmatprep.subr.mxu0 0.0
        %1989 = vmatpush1.msra.mxu0 0.0
        %1990 = vmatprep.subr.mxu0 0.0
        %1991 = vmatpush1.msra.mxu0 0.0
        %1992 = vmatprep.subr.mxu0 0.0
        %1993 = vmatpush1.msra.mxu0 0.0
        %1994 = vmatprep.subr.mxu0 0.0
        %1995 = vmatpush1.msra.mxu0 0.0
        %1996 = vmatprep.subr.mxu0 0.0
        %1997 = vmatpush1.msra.mxu0 0.0
        %1998 = vmatprep.subr.mxu0 0.0
        %1999 = vmatpush1.msra.mxu0 0.0
        %2000 = vmatprep.subr.mxu0 0.0
        %2001 = vmatpush1.msra.mxu0 0.0
        %2002 = vmatprep.subr.mxu0 0.0
        %2003 = vmatpush1.msra.mxu0 0.0
        %2004 = vmatprep.mubr.f32.mxu0 0.0
        %2005 = vmatmul.mubr.f32.gmra.mrb[0].mxu0 %v748
        %v2006 = vpop.f32.mrb[0].mxu0
        %v2007 = vadd.f32 0.0, %v2006
        %v2008 = vpop.f32.mrb[0].mxu0
        %2009 = vdwg.mxu0
        %2010 = vmatprep.subr.mxu0 0.0
        %2011 = vmatpush1.msra.mxu0 %v729
        %2012 = vmatprep.subr.mxu0 0.0
        %2013 = vmatpush1.msra.mxu0 %v734
        %2014 = vmatprep.subr.mxu0 0.0
        %2015 = vmatpush1.msra.mxu0 0.0
        %2016 = vmatprep.subr.mxu0 0.0
        %2017 = vmatpush1.msra.mxu0 0.0
        %2018 = vmatprep.subr.mxu0 0.0
        %2019 = vmatpush1.msra.mxu0 0.0
        %2020 = vmatprep.subr.mxu0 0.0
        %2021 = vmatpush1.msra.mxu0 0.0
        %2022 = vmatprep.subr.mxu0 0.0
        %2023 = vmatpush1.msra.mxu0 0.0
        %2024 = vmatprep.subr.mxu0 0.0
        %2025 = vmatpush1.msra.mxu0 0.0
        %2026 = vmatprep.subr.mxu0 0.0
        %2027 = vmatpush1.msra.mxu0 0.0
        %2028 = vmatprep.subr.mxu0 0.0
        %2029 = vmatpush1.msra.mxu0 0.0
        %2030 = vmatprep.subr.mxu0 0.0
        %2031 = vmatpush1.msra.mxu0 0.0
        %2032 = vmatprep.subr.mxu0 0.0
        %2033 = vmatpush1.msra.mxu0 0.0
        %2034 = vmatprep.subr.mxu0 0.0
        %2035 = vmatpush1.msra.mxu0 0.0
        %2036 = vmatprep.subr.mxu0 0.0
        %2037 = vmatpush1.msra.mxu0 0.0
        %2038 = vmatprep.subr.mxu0 0.0
        %2039 = vmatpush1.msra.mxu0 0.0
        %2040 = vmatprep.subr.mxu0 0.0
        %2041 = vmatpush1.msra.mxu0 0.0
        %2042 = vmatprep.subr.mxu0 0.0
        %2043 = vmatpush1.msra.mxu0 0.0
        %2044 = vmatprep.subr.mxu0 0.0
        %2045 = vmatpush1.msra.mxu0 0.0
        %2046 = vmatprep.subr.mxu0 0.0
        %2047 = vmatpush1.msra.mxu0 0.0
        %2048 = vmatprep.subr.mxu0 0.0
        %2049 = vmatpush1.msra.mxu0 0.0
        %2050 = vmatprep.subr.mxu0 0.0
        %2051 = vmatpush1.msra.mxu0 0.0
        %2052 = vmatprep.subr.mxu0 0.0
        %2053 = vmatpush1.msra.mxu0 0.0
        %2054 = vmatprep.subr.mxu0 0.0
        %2055 = vmatpush1.msra.mxu0 0.0
        %2056 = vmatprep.subr.mxu0 0.0
        %2057 = vmatpush1.msra.mxu0 0.0
        %2058 = vmatprep.subr.mxu0 0.0
        %2059 = vmatpush1.msra.mxu0 0.0
        %2060 = vmatprep.subr.mxu0 0.0
        %2061 = vmatpush1.msra.mxu0 0.0
        %2062 = vmatprep.subr.mxu0 0.0
        %2063 = vmatpush1.msra.mxu0 0.0
        %2064 = vmatprep.subr.mxu0 0.0
        %2065 = vmatpush1.msra.mxu0 0.0
        %2066 = vmatprep.subr.mxu0 0.0
        %2067 = vmatpush1.msra.mxu0 0.0
        %2068 = vmatprep.subr.mxu0 0.0
        %2069 = vmatpush1.msra.mxu0 0.0
        %2070 = vmatprep.subr.mxu0 0.0
        %2071 = vmatpush1.msra.mxu0 0.0
        %2072 = vmatprep.subr.mxu0 0.0
        %2073 = vmatpush1.msra.mxu0 0.0
        %2074 = vmatprep.mubr.f32.mxu0 0.0
        %2075 = vmatmul.mubr.f32.gmra.mrb[0].mxu0 %v748
        %v2076 = vpop.f32.mrb[0].mxu0
        %v2077 = vadd.f32 0.0, %v2076
        %v2078 = vpop.f32.mrb[0].mxu0
        %2079 = vdwg.mxu0
        %2080 = vmatprep.subr.mxu0 0.0
        %2081 = vmatpush1.msra.mxu0 %v739
        %2082 = vmatprep.subr.mxu0 0.0
        %2083 = vmatpush1.msra.mxu0 %v744
        %2084 = vmatprep.subr.mxu0 0.0
        %2085 = vmatpush1.msra.mxu0 0.0
        %2086 = vmatprep.subr.mxu0 0.0
        %2087 = vmatpush1.msra.mxu0 0.0
        %2088 = vmatprep.subr.mxu0 0.0
        %2089 = vmatpush1.msra.mxu0 0.0
        %2090 = vmatprep.subr.mxu0 0.0
        %2091 = vmatpush1.msra.mxu0 0.0
        %2092 = vmatprep.subr.mxu0 0.0
        %2093 = vmatpush1.msra.mxu0 0.0
        %2094 = vmatprep.subr.mxu0 0.0
        %2095 = vmatpush1.msra.mxu0 0.0
        %2096 = vmatprep.subr.mxu0 0.0
        %2097 = vmatpush1.msra.mxu0 0.0
        %2098 = vmatprep.subr.mxu0 0.0
        %2099 = vmatpush1.msra.mxu0 0.0
        %2100 = vmatprep.subr.mxu0 0.0
        %2101 = vmatpush1.msra.mxu0 0.0
        %2102 = vmatprep.subr.mxu0 0.0
        %2103 = vmatpush1.msra.mxu0 0.0
        %2104 = vmatprep.subr.mxu0 0.0
        %2105 = vmatpush1.msra.mxu0 0.0
        %2106 = vmatprep.subr.mxu0 0.0
        %2107 = vmatpush1.msra.mxu0 0.0
        %2108 = vmatprep.subr.mxu0 0.0
        %2109 = vmatpush1.msra.mxu0 0.0
        %2110 = vmatprep.subr.mxu0 0.0
        %2111 = vmatpush1.msra.mxu0 0.0
        %2112 = vmatprep.subr.mxu0 0.0
        %2113 = vmatpush1.msra.mxu0 0.0
        %2114 = vmatprep.subr.mxu0 0.0
        %2115 = vmatpush1.msra.mxu0 0.0
        %2116 = vmatprep.subr.mxu0 0.0
        %2117 = vmatpush1.msra.mxu0 0.0
        %2118 = vmatprep.subr.mxu0 0.0
        %2119 = vmatpush1.msra.mxu0 0.0
        %2120 = vmatprep.subr.mxu0 0.0
        %2121 = vmatpush1.msra.mxu0 0.0
        %2122 = vmatprep.subr.mxu0 0.0
        %2123 = vmatpush1.msra.mxu0 0.0
        %2124 = vmatprep.subr.mxu0 0.0
        %2125 = vmatpush1.msra.mxu0 0.0
        %2126 = vmatprep.subr.mxu0 0.0
        %2127 = vmatpush1.msra.mxu0 0.0
        %2128 = vmatprep.subr.mxu0 0.0
        %2129 = vmatpush1.msra.mxu0 0.0
        %2130 = vmatprep.subr.mxu0 0.0
        %2131 = vmatpush1.msra.mxu0 0.0
        %2132 = vmatprep.subr.mxu0 0.0
        %2133 = vmatpush1.msra.mxu0 0.0
        %2134 = vmatprep.subr.mxu0 0.0
        %2135 = vmatpush1.msra.mxu0 0.0
        %2136 = vmatprep.subr.mxu0 0.0
        %2137 = vmatpush1.msra.mxu0 0.0
        %2138 = vmatprep.subr.mxu0 0.0
        %2139 = vmatpush1.msra.mxu0 0.0
        %2140 = vmatprep.subr.mxu0 0.0
        %2141 = vmatpush1.msra.mxu0 0.0
        %2142 = vmatprep.subr.mxu0 0.0
        %2143 = vmatpush1.msra.mxu0 0.0
        %2144 = vmatprep.mubr.f32.mxu0 0.0
        %2145 = vmatmul.mubr.f32.gmra.mrb[0].mxu0 %v748
        %v2146 = vpop.f32.mrb[0].mxu0
        %v2147 = vadd.f32 0.0, %v2146
        %v2148 = vpop.f32.mrb[0].mxu0
        %2149 = vdwg.mxu0
        %v2150 = vmul.f32 %v817, %v817
        %v2151 = vmul.f32 %v887, %v887
        %v2152 = vmul.f32 %v957, %v957
        %v2153 = vmul.f32 %v1027, %v1027
        %v2154 = vmul.f32 %v1097, %v1097
        %v2155 = vmul.f32 %v1167, %v1167
        %v2156 = vmul.f32 %v1237, %v1237
        %v2157 = vmul.f32 %v1307, %v1307
        %v2158 = vmul.f32 %v817, %v1097
        %v2159 = vmul.f32 %v887, %v1167
        %v2160 = vmul.f32 %v957, %v1237
        %v2161 = vmul.f32 %v1027, %v1307
        %v2162 = vsub.f32 %v1377, %v2150
        %v2163 = vsub.f32 %v1447, %v2151
        %v2164 = vsub.f32 %v1517, %v2152
        %v2165 = vsub.f32 %v1587, %v2153
        %v2166 = vsub.f32 %v1657, %v2154
        %v2167 = vsub.f32 %v1727, %v2155
        %v2168 = vsub.f32 %v1797, %v2156
        %v2169 = vsub.f32 %v1867, %v2157
        %v2170 = vsub.f32 %v1937, %v2158
        %v2171 = vsub.f32 %v2007, %v2159
        %v2172 = vsub.f32 %v2077, %v2160
        %v2173 = vsub.f32 %v2147, %v2161
        %v2174 = vmul.f32 %v2170, 2.0
        %v2175 = vmul.f32 %v2171, 2.0
        %v2176 = vmul.f32 %v2172, 2.0
        %v2177 = vmul.f32 %v2173, 2.0
        %v2178 = vstv %s317
        %v2179 = vadd.f32 %v2174, %v2178
        %v2180 = vadd.f32 %v2175, %v2178
        %v2181 = vadd.f32 %v2176, %v2178
        %v2182 = vadd.f32 %v2177, %v2178
        %v2183 = vadd.f32 %v2162, %v2166
        %v2184 = vadd.f32 %v2163, %v2167
        %v2185 = vadd.f32 %v2164, %v2168
        %v2186 = vadd.f32 %v2165, %v2169
        %v2187 = vadd.f32 %v2183, %v2178
        %v2188 = vadd.f32 %v2184, %v2178
        %v2189 = vadd.f32 %v2185, %v2178
        %v2190 = vadd.f32 %v2186, %v2178
        %v2191 = vmul.f32 %v2158, 2.0
        %v2192 = vmul.f32 %v2159, 2.0
        %v2193 = vmul.f32 %v2160, 2.0
        %v2194 = vmul.f32 %v2161, 2.0
        %v2195 = vstv %s316
        %v2196 = vadd.f32 %v2191, %v2195
        %v2197 = vadd.f32 %v2192, %v2195
        %v2198 = vadd.f32 %v2193, %v2195
        %v2199 = vadd.f32 %v2194, %v2195
        %v2200 = vmul.f32 %v2196, %v2179
        %v2201 = vmul.f32 %v2197, %v2180
        %v2202 = vmul.f32 %v2198, %v2181
        %v2203 = vmul.f32 %v2199, %v2182
        %v2204 = vadd.f32 %v2150, %v2154
        %v2205 = vadd.f32 %v2151, %v2155
        %v2206 = vadd.f32 %v2152, %v2156
        %v2207 = vadd.f32 %v2153, %v2157
        %v2208 = vadd.f32 %v2204, %v2195
        %v2209 = vadd.f32 %v2205, %v2195
        %v2210 = vadd.f32 %v2206, %v2195
        %v2211 = vadd.f32 %v2207, %v2195
        %v2212 = vmul.f32 %v2208, %v2187
        %v2213 = vmul.f32 %v2209, %v2188
        %v2214 = vmul.f32 %v2210, %v2189
        %v2215 = vmul.f32 %v2211, %v2190
        %v2216 = vrcp.pop %v2212
        %v2217 = vrcp.pop %v2213
        %v2218 = vrcp.pop %v2214
        %v2219 = vrcp.pop %v2215
        %v2220 = vmul.f32 %v2200, %v2216
        %v2221 = vmul.f32 %v2201, %v2217
        %v2222 = vmul.f32 %v2202, %v2218
        %v2223 = vmul.f32 %v2203, %v2219
        %v2224 = vlaneseq
        %v2225 = vshrl.u32 %v2224, 7
        %vm2226 = vcmp.lt.s32.totalorder %v2225, 6
        %v2227 = vsel %vm2226, %v2220, 0.0
        %v2228 = vsel %vm2226, %v2221, 0.0
        %v2229 = vsel %vm2226, %v2222, 0.0
        %v2230 = vsel %vm2226, %v2223, 0.0
        %v2231 = vadd.f32 %v2227, %v2228
        %v2232 = vadd.f32 %v2231, %v2229
        %v2233 = vadd.f32 %v2232, %v2230
        %v2234 = vrot.slane %v2233, 4
        %v2235 = vadd.f32 %v2233, %v2234
        %v2236 = vrot.slane %v2235, 2
        %v2237 = vadd.f32 %v2235, %v2236
        %v2238 = vrot.slane %v2237, 1
        %v2239 = vadd.f32 %v2237, %v2238
        %2240 = vst [vmem:[%s315] sm:$0x1] %v2239
        %s2241 = sand.u32 %s145, 1
        %s2242 = scalar_lea.sflag [#allocation4], %s2241
        %s2243 = sand.u32 %s145, 1
        %s2244 = scalar_lea.vmem [#allocation11], %s2243
        // Predicated region
        $region61: #{tpu_custom_call.1} parent=39 // pred_check
          %p2245 = pneg %p155
        $region62: #{tpu_custom_call.1} parent=39 // pred_check_branch
          %2247 = sbr.rel (%p2245) target = $region64
        $region63: #{tpu_custom_call.1} parent=39 // pred_region
          %s2249 = ssub.s32 16, 16
          %2250 = vsyncadd %s2242, %s2249
          %s2251 = smul.addr %s22, 16
          %s2252 = scalar_lea.hbm %s5, %s2251
          %s2254 = sshll.u32 %s2244, 4
          %s2255 = int_to_ptr.vmem [resolvable:$true] %s2254
          %2257 = dma.vmem_to_hbm [thread:$0]  %s2255, 16, %s2252, %s2242
        $region64: #{tpu_custom_call.1} parent=39 // pred_fallthru
          _
      $region40: #{tpu_custom_call.1} parent=5 // pred_fallthru
        _
      %p2258 = scmp.le.s32.totalorder 2, %s17
      // Predicated region
      $region65: #{tpu_custom_call.1} parent=5 // pred_check
        %p2259 = pneg %p2258
      $region66: #{tpu_custom_call.1} parent=5 // pred_check_branch
        %2261 = sbr.rel (%p2259) target = $region68
      $region67: #{tpu_custom_call.1} parent=5 // pred_region
        %s2262 = ssub.s32 %s17, 2
        // Predicated region
        $region69: #{tpu_custom_call.1} parent=67 // pred_check
          %p2263 = pneg %p161
        $region70: #{tpu_custom_call.1} parent=67 // pred_check_branch
          %2265 = sbr.rel (%p2263) target = $region72
        $region71: #{tpu_custom_call.1} parent=67 // pred_region
          %s2266 = sand.u32 %s146, 1
          %s2267 = scalar_lea.sflag [#allocation4], %s2266
          %s2268 = sand.u32 %s146, 1
          %s2269 = scalar_lea.vmem [#allocation11], %s2268
          %2270 = dma.done %s2267, 16
        $region72: #{tpu_custom_call.1} parent=67 // pred_fallthru
          _
      $region68: #{tpu_custom_call.1} parent=5 // pred_fallthru
        _
    $region6: #{tpu_custom_call.1} parent=1 // loop_footer
      %s21 = sadd.s32 1, %s17
    $region7: #{tpu_custom_call.1} parent=1 // loop_footer_branch
      %16 = sbr.rel target = $region3
    $region8: #{tpu_custom_call.1} parent=1 // loop_exit
      _
    %2271 = vsyncpa [#allocation3], 1
    %s2272 = scalar_lea.sflag [#allocation3], 1
    %2273 = vsyncpa %s2272, 1
    %2274 = vsyncpa [#allocation8], 1
    %2275 = vsyncpa [#allocation4], 1
    %s2276 = scalar_lea.sflag [#allocation4], 1
    %2277 = vsyncpa %s2276, 1
    %2278 = vsyncpa [#allocation5], 1
    %s2279 = scalar_lea.sflag [#allocation5], 1
    %2280 = vsyncpa %s2279, 1

</llo_original>
